<compile_context>
chip_gen: v7x
topology: tpu7x:2x2x1
jax: 0.10.0
libtpu: 0.0.40
codegen_flags: <defaults>
</compile_context>

<pallas_src>
import functools

import jax
import jax.numpy as jnp
from jax.experimental import pallas as pl
from jax.experimental.pallas import tpu as pltpu

HID = 32        # hid_channels
KSIZE = 4       # conv kernel size
HIDDEN = 256    # MLP hidden dim
MIN_IC = 8      # pad tiny input-channel counts (conv1) so K = 16*8 = 128 is lane-dense


# ----------------------- conv layer: one MXU matmul --------------------------
def _matmul_bias_relu_kernel(x_ref, w_ref, b_ref, o_ref):
    """(bm, K) @ (K, OC) + bias, ReLU; f32 accumulate/epilogue, bf16 store."""
    y = jnp.dot(x_ref[...], w_ref[...], preferred_element_type=jnp.float32)
    y = jnp.maximum(y + b_ref[...], 0.0)
    o_ref[...] = y.astype(o_ref.dtype)


def _im2col_s2k4p1(x_nhwc):
    """im2col for Conv2d(k=4, stride=2, pad=1) on an NHWC input.

    Returns (N*OH*OW, 16*C) patches with K ordered (kh, kw, c).  Pure XLA
    pad/slice/concat on tiny activations; the trailing reshape is a free
    row-major view.
    """
    N, H, W, C = x_nhwc.shape
    OH, OW = H // 2, W // 2
    xp = jnp.pad(x_nhwc, ((0, 0), (1, 1), (1, 1), (0, 0)))
    xp = xp.reshape(N, OH + 1, 2, OW + 1, 2, C)          # (N, rh, ph, rw, pw, C)
    cols = []
    for kh in range(KSIZE):
        ph, dh = kh % 2, kh // 2
        for kw in range(KSIZE):
            pw, dw = kw % 2, kw // 2
            # element (n, oh, ow, c) = padded[n, 2*oh + kh, 2*ow + kw, c]
            cols.append(xp[:, dh:dh + OH, ph, dw:dw + OW, pw, :])
    patches = jnp.concatenate(cols, axis=-1)              # (N, OH, OW, 16*C)
    return patches.reshape(N * OH * OW, KSIZE * KSIZE * C), OH, OW


def conv2d_relu(x_nhwc, w_mat, b_row):
    """PyTorch-semantics Conv2d(k=4, s=2, p=1) + bias + ReLU as one matmul."""
    N = x_nhwc.shape[0]
    patches, OH, OW = _im2col_s2k4p1(x_nhwc)
    M, K = patches.shape
    OC = w_mat.shape[-1]
    # Two "parallel" grid steps (batch folded into M) so both v7x TCs get
    # work; fall back to one block if M can't be split on bf16 sublane tiles.
    nb = 2 if (M % 2 == 0 and (M // 2) % 16 == 0) else 1
    bm = M // nb
    out = pl.pallas_call(
        _matmul_bias_relu_kernel,
        out_shape=jax.ShapeDtypeStruct((M, OC), jnp.bfloat16),
        grid=(nb,),
        in_specs=[
            pl.BlockSpec((bm, K), lambda i: (i, 0)),
            pl.BlockSpec((K, OC), lambda i: (0, 0)),
            pl.BlockSpec((1, OC), lambda i: (0, 0)),
        ],
        out_specs=pl.BlockSpec((bm, OC), lambda i: (i, 0)),
        compiler_params=pltpu.CompilerParams(
            dimension_semantics=("parallel",)),
    )(patches, w_mat, b_row)
    return out.reshape(N, OH, OW, OC)                     # free row-major reshape


# ----------------------------- fused MLP tail ---------------------------------
def _mlp_kernel(x_ref, w1_ref, b1_ref, w2_ref, b2_ref, w3_ref, b3_ref, o_ref):
    h = jnp.dot(x_ref[...], w1_ref[...], preferred_element_type=jnp.float32)
    h = jnp.maximum(h + b1_ref[...], 0.0)
    h = jnp.dot(h.astype(jnp.bfloat16), w2_ref[...],
                preferred_element_type=jnp.float32)
    h = jnp.maximum(h + b2_ref[...], 0.0)
    # lin3 (out_features=1): VPU multiply + lane reduction, no 1-lane matmul.
    o_ref[...] = jnp.sum(h * w3_ref[...], axis=-1, keepdims=True) + b3_ref[...]


def mlp_head(x_flat, params):
    B, K = x_flat.shape
    H = params["lin1_w"].shape[1]
    return pl.pallas_call(
        _mlp_kernel,
        out_shape=jax.ShapeDtypeStruct((B, 1), jnp.float32),
        grid=(1,),
        in_specs=[
            pl.BlockSpec((B, K), lambda i: (0, 0)),
            pl.BlockSpec((K, H), lambda i: (0, 0)),
            pl.BlockSpec((1, H), lambda i: (0, 0)),
            pl.BlockSpec((H, H), lambda i: (0, 0)),
            pl.BlockSpec((1, H), lambda i: (0, 0)),
            pl.BlockSpec((1, H), lambda i: (0, 0)),
            pl.BlockSpec((1, 1), lambda i: (0, 0)),
        ],
        out_specs=pl.BlockSpec((B, 1), lambda i: (0, 0)),
        compiler_params=pltpu.CompilerParams(
            dimension_semantics=("arbitrary",)),
    )(x_flat.astype(jnp.bfloat16), params["lin1_w"], params["lin1_b"],
      params["lin2_w"], params["lin2_b"], params["lin3_w"], params["lin3_b"])


# ----------------------------- VAR parameters ---------------------------------
def init_var_params(key, img_size):
    """PyTorch-default init, pre-packed into kernel-friendly layouts/dtypes."""
    if list(img_size[1:]) not in [[32, 32], [64, 64]]:
        raise RuntimeError(
            "{} sized images not supported; only (*, 32, 32) / (*, 64, 64)".format(img_size))
    n_chan = img_size[0]
    reshape_prod = HID * KSIZE * KSIZE   # 512

    def uniform(k_, shape, fan_in):
        bound = 1.0 / (fan_in ** 0.5)
        return jax.random.uniform(k_, shape, jnp.float32, -bound, bound)

    def conv_params(k_, ic, oc):
        kw_, kb_ = jax.random.split(k_)
        fan_in = ic * KSIZE * KSIZE
        w = uniform(kw_, (oc, ic, KSIZE, KSIZE), fan_in)      # PyTorch (OC,IC,KH,KW)
        b = uniform(kb_, (oc,), fan_in)
        ic_pad = max(ic, MIN_IC)                               # conv1: lane-dense K
        w_khkwic = jnp.transpose(w, (2, 3, 1, 0))              # (KH, KW, IC, OC)
        w_khkwic = jnp.pad(w_khkwic, ((0, 0), (0, 0), (0, ic_pad - ic), (0, 0)))
        w_mat = w_khkwic.reshape(KSIZE * KSIZE * ic_pad, oc)   # K-ordered (kh,kw,c)
        return w_mat.astype(jnp.bfloat16), b.reshape(1, oc)

    def linear_params(k_, in_dim, out_dim):
        kw_, kb_ = jax.random.split(k_)
        w = uniform(kw_, (out_dim, in_dim), in_dim)            # PyTorch (out, in)
        b = uniform(kb_, (out_dim,), in_dim)
        return w.T.astype(jnp.bfloat16), b.reshape(1, out_dim)

    keys = jax.random.split(key, 7)
    params = {}
    params["conv1_w"], params["conv1_b"] = conv_params(keys[0], n_chan, HID)
    params["conv2_w"], params["conv2_b"] = conv_params(keys[1], HID, HID)
    params["conv3_w"], params["conv3_b"] = conv_params(keys[2], HID, HID)
    if img_size[1] == img_size[2] == 64:
        params["conv64_w"], params["conv64_b"] = conv_params(keys[3], HID, HID)
    # lin1: permute weight rows from PyTorch (C, H, W) flatten order to the
    # (H, W, C) order the conv stack produces, so no runtime transpose is
    # needed before the flatten.
    w1_t, params["lin1_b"] = linear_params(keys[4], reshape_prod, HIDDEN)
    w1_t = w1_t.reshape(HID, KSIZE * KSIZE, HIDDEN)            # rows: (c, h*w)
    params["lin1_w"] = jnp.transpose(w1_t, (1, 0, 2)).reshape(reshape_prod, HIDDEN)
    params["lin2_w"], params["lin2_b"] = linear_params(keys[5], HIDDEN, HIDDEN)
    kw_, kb_ = jax.random.split(keys[6])
    params["lin3_w"] = uniform(kw_, (1, HIDDEN), HIDDEN)       # f32 row for VPU reduce
    params["lin3_b"] = uniform(kb_, (1, 1), HIDDEN)
    return params


# ------------------------------ VAR forward -----------------------------------
def var_forward(params, x_nchw, img_size):
    n_chan = img_size[0]
    x = jnp.transpose(x_nchw, (0, 2, 3, 1)).astype(jnp.bfloat16)   # NCHW -> NHWC once
    if n_chan < MIN_IC:   # zero-pad channels once so conv1's K is lane-dense (128)
        x = jnp.pad(x, ((0, 0), (0, 0), (0, 0), (0, MIN_IC - n_chan)))
    x = conv2d_relu(x, params["conv1_w"], params["conv1_b"])
    x = conv2d_relu(x, params["conv2_w"], params["conv2_b"])
    x = conv2d_relu(x, params["conv3_w"], params["conv3_b"])
    if img_size[1] == img_size[2] == 64:
        x = conv2d_relu(x, params["conv64_w"], params["conv64_b"])
    b = x.shape[0]
    # (H, W, C) flatten; lin1 rows were permuted at init to match, so this
    # reshape is a free row-major view (no transpose, no extra HBM traffic).
    x = x.reshape(b, -1)
    return mlp_head(x, params)                                     # (batch, 1) f32


if __name__ == "__main__":
    img_size = (3, 32, 32)      # (n_chan, H, W) -- 32x32 branch of VAR
    batch = 2

    key = jax.random.PRNGKey(0)
    k_param, k_x = jax.random.split(key)
    params = init_var_params(k_param, img_size)
    x = jax.random.normal(k_x, (batch,) + img_size, dtype=jnp.float32)

    fwd = jax.jit(functools.partial(var_forward, img_size=img_size))
    out = jax.block_until_ready(fwd(params, x))
    assert out.shape == (batch, 1) and out.dtype == jnp.float32
    print("KERNEL_OK")
</pallas_src>

<mosaic_0001>
module attributes {stable_mosaic.version = 11 : i64} {
  func.func @_matmul_bias_relu_kernel(%arg0: i32, %arg1: memref<256x128xbf16, #tpu.memory_space<vmem>>, %arg2: memref<128x32xbf16, #tpu.memory_space<vmem>>, %arg3: memref<1x32xf32, #tpu.memory_space<vmem>>, %arg4: memref<256x32xbf16, #tpu.memory_space<vmem>>) attributes {dimension_semantics = [#tpu.dimension_semantics<parallel>], iteration_bounds = array<i64: 2>, scalar_prefetch = 0 : i64, scratch_operands = 0 : i64, tpu.core_type = #tpu.core_type<tc>, window_params = [{transform_indices = @transform_0, window_bounds = array<i64: 256, 128>}, {pipeline_mode = #tpu.pipeline_mode<synchronous>, transform_indices = @transform_1, window_bounds = array<i64: 128, 32>}, {pipeline_mode = #tpu.pipeline_mode<synchronous>, transform_indices = @transform_2, window_bounds = array<i64: 1, 32>}, {transform_indices = @transform_3, window_bounds = array<i64: 256, 32>}]} {
    %c0 = arith.constant 0 : index
    %c0_0 = arith.constant 0 : index
    %0 = vector.load %arg1[%c0, %c0_0] : memref<256x128xbf16, #tpu.memory_space<vmem>>, vector<256x128xbf16>
    %c0_1 = arith.constant 0 : index
    %c0_2 = arith.constant 0 : index
    %1 = vector.load %arg2[%c0_1, %c0_2] : memref<128x32xbf16, #tpu.memory_space<vmem>>, vector<128x32xbf16>
    %cst = arith.constant dense<0.000000e+00> : vector<256x32xf32>
    %2 = tpu.matmul %0, %1, %cst {dimension_numbers = #tpu.dot_dimension_numbers<[1], [0], [0], [1], [0, 0, 1, 1], [], []>} : vector<256x128xbf16>, vector<128x32xbf16>, vector<256x32xf32> -> vector<256x32xf32>
    %c0_3 = arith.constant 0 : index
    %c0_4 = arith.constant 0 : index
    %3 = vector.load %arg3[%c0_3, %c0_4] : memref<1x32xf32, #tpu.memory_space<vmem>>, vector<1x32xf32>
    %4 = vector.broadcast %3 : vector<1x32xf32> to vector<256x32xf32>
    %5 = arith.addf %2, %4 : vector<256x32xf32>
    %cst_5 = arith.constant 0.000000e+00 : f32
    %6 = vector.broadcast %cst_5 : f32 to vector<256x32xf32>
    %7 = arith.maximumf %5, %6 : vector<256x32xf32>
    %8 = arith.truncf %7 : vector<256x32xf32> to vector<256x32xbf16>
    %c0_6 = arith.constant 0 : index
    %c0_7 = arith.constant 0 : index
    %9 = vector.load %arg4[%c0_6, %c0_7] : memref<256x32xbf16, #tpu.memory_space<vmem>>, vector<256x32xbf16>
    tpu.vector_store %arg4[%c0_6, %c0_7], %8 {strides = array<i32>} : memref<256x32xbf16, #tpu.memory_space<vmem>>, vector<256x32xbf16>,
    return
  }
  func.func @transform_0(%arg0: i32) -> (i32, i32) {
    %c0_i32 = arith.constant 0 : i32
    %c0_i32_0 = arith.constant 0 : i32
    return %arg0, %c0_i32 : i32, i32
  }
  func.func @transform_1(%arg0: i32) -> (i32, i32) {
    %c0_i32 = arith.constant 0 : i32
    %c0_i32_0 = arith.constant 0 : i32
    %c0_i32_1 = arith.constant 0 : i32
    return %c0_i32, %c0_i32_0 : i32, i32
  }
  func.func @transform_2(%arg0: i32) -> (i32, i32) {
    %c0_i32 = arith.constant 0 : i32
    %c0_i32_0 = arith.constant 0 : i32
    %c0_i32_1 = arith.constant 0 : i32
    return %c0_i32, %c0_i32_0 : i32, i32
  }
  func.func @transform_3(%arg0: i32) -> (i32, i32) {
    %c0_i32 = arith.constant 0 : i32
    %c0_i32_0 = arith.constant 0 : i32
    return %arg0, %c0_i32 : i32, i32
  }
}

module attributes {stable_mosaic.version = 11 : i64} {
  func.func @_matmul_bias_relu_kernel(%arg0: i32, %arg1: memref<64x512xbf16, #tpu.memory_space<vmem>>, %arg2: memref<512x32xbf16, #tpu.memory_space<vmem>>, %arg3: memref<1x32xf32, #tpu.memory_space<vmem>>, %arg4: memref<64x32xbf16, #tpu.memory_space<vmem>>) attributes {dimension_semantics = [#tpu.dimension_semantics<parallel>], iteration_bounds = array<i64: 2>, scalar_prefetch = 0 : i64, scratch_operands = 0 : i64, tpu.core_type = #tpu.core_type<tc>, window_params = [{transform_indices = @transform_0, window_bounds = array<i64: 64, 512>}, {pipeline_mode = #tpu.pipeline_mode<synchronous>, transform_indices = @transform_1, window_bounds = array<i64: 512, 32>}, {pipeline_mode = #tpu.pipeline_mode<synchronous>, transform_indices = @transform_2, window_bounds = array<i64: 1, 32>}, {transform_indices = @transform_3, window_bounds = array<i64: 64, 32>}]} {
    %c0 = arith.constant 0 : index
    %c0_0 = arith.constant 0 : index
    %0 = vector.load %arg1[%c0, %c0_0] : memref<64x512xbf16, #tpu.memory_space<vmem>>, vector<64x512xbf16>
    %c0_1 = arith.constant 0 : index
    %c0_2 = arith.constant 0 : index
    %1 = vector.load %arg2[%c0_1, %c0_2] : memref<512x32xbf16, #tpu.memory_space<vmem>>, vector<512x32xbf16>
    %cst = arith.constant dense<0.000000e+00> : vector<64x32xf32>
    %2 = tpu.matmul %0, %1, %cst {dimension_numbers = #tpu.dot_dimension_numbers<[1], [0], [0], [1], [0, 0, 1, 1], [], []>} : vector<64x512xbf16>, vector<512x32xbf16>, vector<64x32xf32> -> vector<64x32xf32>
    %c0_3 = arith.constant 0 : index
    %c0_4 = arith.constant 0 : index
    %3 = vector.load %arg3[%c0_3, %c0_4] : memref<1x32xf32, #tpu.memory_space<vmem>>, vector<1x32xf32>
    %4 = vector.broadcast %3 : vector<1x32xf32> to vector<64x32xf32>
    %5 = arith.addf %2, %4 : vector<64x32xf32>
    %cst_5 = arith.constant 0.000000e+00 : f32
    %6 = vector.broadcast %cst_5 : f32 to vector<64x32xf32>
    %7 = arith.maximumf %5, %6 : vector<64x32xf32>
    %8 = arith.truncf %7 : vector<64x32xf32> to vector<64x32xbf16>
    %c0_6 = arith.constant 0 : index
    %c0_7 = arith.constant 0 : index
    %9 = vector.load %arg4[%c0_6, %c0_7] : memref<64x32xbf16, #tpu.memory_space<vmem>>, vector<64x32xbf16>
    tpu.vector_store %arg4[%c0_6, %c0_7], %8 {strides = array<i32>} : memref<64x32xbf16, #tpu.memory_space<vmem>>, vector<64x32xbf16>,
    return
  }
  func.func @transform_0(%arg0: i32) -> (i32, i32) {
    %c0_i32 = arith.constant 0 : i32
    %c0_i32_0 = arith.constant 0 : i32
    return %arg0, %c0_i32 : i32, i32
  }
  func.func @transform_1(%arg0: i32) -> (i32, i32) {
    %c0_i32 = arith.constant 0 : i32
    %c0_i32_0 = arith.constant 0 : i32
    %c0_i32_1 = arith.constant 0 : i32
    return %c0_i32, %c0_i32_0 : i32, i32
  }
  func.func @transform_2(%arg0: i32) -> (i32, i32) {
    %c0_i32 = arith.constant 0 : i32
    %c0_i32_0 = arith.constant 0 : i32
    %c0_i32_1 = arith.constant 0 : i32
    return %c0_i32, %c0_i32_0 : i32, i32
  }
  func.func @transform_3(%arg0: i32) -> (i32, i32) {
    %c0_i32 = arith.constant 0 : i32
    %c0_i32_0 = arith.constant 0 : i32
    return %arg0, %c0_i32 : i32, i32
  }
}

module attributes {stable_mosaic.version = 11 : i64} {
  func.func @_matmul_bias_relu_kernel(%arg0: i32, %arg1: memref<16x512xbf16, #tpu.memory_space<vmem>>, %arg2: memref<512x32xbf16, #tpu.memory_space<vmem>>, %arg3: memref<1x32xf32, #tpu.memory_space<vmem>>, %arg4: memref<16x32xbf16, #tpu.memory_space<vmem>>) attributes {dimension_semantics = [#tpu.dimension_semantics<parallel>], iteration_bounds = array<i64: 2>, scalar_prefetch = 0 : i64, scratch_operands = 0 : i64, tpu.core_type = #tpu.core_type<tc>, window_params = [{transform_indices = @transform_0, window_bounds = array<i64: 16, 512>}, {pipeline_mode = #tpu.pipeline_mode<synchronous>, transform_indices = @transform_1, window_bounds = array<i64: 512, 32>}, {pipeline_mode = #tpu.pipeline_mode<synchronous>, transform_indices = @transform_2, window_bounds = array<i64: 1, 32>}, {transform_indices = @transform_3, window_bounds = array<i64: 16, 32>}]} {
    %c0 = arith.constant 0 : index
    %c0_0 = arith.constant 0 : index
    %0 = vector.load %arg1[%c0, %c0_0] : memref<16x512xbf16, #tpu.memory_space<vmem>>, vector<16x512xbf16>
    %c0_1 = arith.constant 0 : index
    %c0_2 = arith.constant 0 : index
    %1 = vector.load %arg2[%c0_1, %c0_2] : memref<512x32xbf16, #tpu.memory_space<vmem>>, vector<512x32xbf16>
    %cst = arith.constant dense<0.000000e+00> : vector<16x32xf32>
    %2 = tpu.matmul %0, %1, %cst {dimension_numbers = #tpu.dot_dimension_numbers<[1], [0], [0], [1], [0, 0, 1, 1], [], []>} : vector<16x512xbf16>, vector<512x32xbf16>, vector<16x32xf32> -> vector<16x32xf32>
    %c0_3 = arith.constant 0 : index
    %c0_4 = arith.constant 0 : index
    %3 = vector.load %arg3[%c0_3, %c0_4] : memref<1x32xf32, #tpu.memory_space<vmem>>, vector<1x32xf32>
    %4 = vector.broadcast %3 : vector<1x32xf32> to vector<16x32xf32>
    %5 = arith.addf %2, %4 : vector<16x32xf32>
    %cst_5 = arith.constant 0.000000e+00 : f32
    %6 = vector.broadcast %cst_5 : f32 to vector<16x32xf32>
    %7 = arith.maximumf %5, %6 : vector<16x32xf32>
    %8 = arith.truncf %7 : vector<16x32xf32> to vector<16x32xbf16>
    %c0_6 = arith.constant 0 : index
    %c0_7 = arith.constant 0 : index
    %9 = vector.load %arg4[%c0_6, %c0_7] : memref<16x32xbf16, #tpu.memory_space<vmem>>, vector<16x32xbf16>
    tpu.vector_store %arg4[%c0_6, %c0_7], %8 {strides = array<i32>} : memref<16x32xbf16, #tpu.memory_space<vmem>>, vector<16x32xbf16>,
    return
  }
  func.func @transform_0(%arg0: i32) -> (i32, i32) {
    %c0_i32 = arith.constant 0 : i32
    %c0_i32_0 = arith.constant 0 : i32
    return %arg0, %c0_i32 : i32, i32
  }
  func.func @transform_1(%arg0: i32) -> (i32, i32) {
    %c0_i32 = arith.constant 0 : i32
    %c0_i32_0 = arith.constant 0 : i32
    %c0_i32_1 = arith.constant 0 : i32
    return %c0_i32, %c0_i32_0 : i32, i32
  }
  func.func @transform_2(%arg0: i32) -> (i32, i32) {
    %c0_i32 = arith.constant 0 : i32
    %c0_i32_0 = arith.constant 0 : i32
    %c0_i32_1 = arith.constant 0 : i32
    return %c0_i32, %c0_i32_0 : i32, i32
  }
  func.func @transform_3(%arg0: i32) -> (i32, i32) {
    %c0_i32 = arith.constant 0 : i32
    %c0_i32_0 = arith.constant 0 : i32
    return %arg0, %c0_i32 : i32, i32
  }
}

module attributes {stable_mosaic.version = 11 : i64} {
  func.func @_mlp_kernel(%arg0: i32, %arg1: memref<2x512xbf16, #tpu.memory_space<vmem>>, %arg2: memref<512x256xbf16, #tpu.memory_space<vmem>>, %arg3: memref<1x256xf32, #tpu.memory_space<vmem>>, %arg4: memref<256x256xbf16, #tpu.memory_space<vmem>>, %arg5: memref<1x256xf32, #tpu.memory_space<vmem>>, %arg6: memref<1x256xf32, #tpu.memory_space<vmem>>, %arg7: memref<1x1xf32, #tpu.memory_space<vmem>>, %arg8: memref<2x1xf32, #tpu.memory_space<vmem>>) attributes {dimension_semantics = [#tpu.dimension_semantics<arbitrary>], iteration_bounds = array<i64: 1>, scalar_prefetch = 0 : i64, scratch_operands = 0 : i64, tpu.core_type = #tpu.core_type<tc>, window_params = [{pipeline_mode = #tpu.pipeline_mode<synchronous>, transform_indices = @transform_0, window_bounds = array<i64: 2, 512>}, {pipeline_mode = #tpu.pipeline_mode<synchronous>, transform_indices = @transform_1, window_bounds = array<i64: 512, 256>}, {pipeline_mode = #tpu.pipeline_mode<synchronous>, transform_indices = @transform_2, window_bounds = array<i64: 1, 256>}, {pipeline_mode = #tpu.pipeline_mode<synchronous>, transform_indices = @transform_3, window_bounds = array<i64: 256, 256>}, {pipeline_mode = #tpu.pipeline_mode<synchronous>, transform_indices = @transform_4, window_bounds = array<i64: 1, 256>}, {pipeline_mode = #tpu.pipeline_mode<synchronous>, transform_indices = @transform_5, window_bounds = array<i64: 1, 256>}, {pipeline_mode = #tpu.pipeline_mode<synchronous>, transform_indices = @transform_6, window_bounds = array<i64: 1, 1>}, {pipeline_mode = #tpu.pipeline_mode<synchronous>, transform_indices = @transform_7, window_bounds = array<i64: 2, 1>}]} {
    %c0 = arith.constant 0 : index
    %c0_0 = arith.constant 0 : index
    %0 = vector.load %arg1[%c0, %c0_0] : memref<2x512xbf16, #tpu.memory_space<vmem>>, vector<2x512xbf16>
    %c0_1 = arith.constant 0 : index
    %c0_2 = arith.constant 0 : index
    %1 = vector.load %arg2[%c0_1, %c0_2] : memref<512x256xbf16, #tpu.memory_space<vmem>>, vector<512x256xbf16>
    %cst = arith.constant dense<0.000000e+00> : vector<2x256xf32>
    %2 = tpu.matmul %0, %1, %cst {dimension_numbers = #tpu.dot_dimension_numbers<[1], [0], [0], [1], [0, 0, 1, 1], [], []>} : vector<2x512xbf16>, vector<512x256xbf16>, vector<2x256xf32> -> vector<2x256xf32>
    %c0_3 = arith.constant 0 : index
    %c0_4 = arith.constant 0 : index
    %3 = vector.load %arg3[%c0_3, %c0_4] : memref<1x256xf32, #tpu.memory_space<vmem>>, vector<1x256xf32>
    %4 = vector.broadcast %3 : vector<1x256xf32> to vector<2x256xf32>
    %5 = arith.addf %2, %4 : vector<2x256xf32>
    %cst_5 = arith.constant 0.000000e+00 : f32
    %6 = vector.broadcast %cst_5 : f32 to vector<2x256xf32>
    %7 = arith.maximumf %5, %6 : vector<2x256xf32>
    %8 = arith.truncf %7 : vector<2x256xf32> to vector<2x256xbf16>
    %c0_6 = arith.constant 0 : index
    %c0_7 = arith.constant 0 : index
    %9 = vector.load %arg4[%c0_6, %c0_7] : memref<256x256xbf16, #tpu.memory_space<vmem>>, vector<256x256xbf16>
    %cst_8 = arith.constant dense<0.000000e+00> : vector<2x256xf32>
    %10 = tpu.matmul %8, %9, %cst_8 {dimension_numbers = #tpu.dot_dimension_numbers<[1], [0], [0], [1], [0, 0, 1, 1], [], []>} : vector<2x256xbf16>, vector<256x256xbf16>, vector<2x256xf32> -> vector<2x256xf32>
    %c0_9 = arith.constant 0 : index
    %c0_10 = arith.constant 0 : index
    %11 = vector.load %arg5[%c0_9, %c0_10] : memref<1x256xf32, #tpu.memory_space<vmem>>, vector<1x256xf32>
    %12 = vector.broadcast %11 : vector<1x256xf32> to vector<2x256xf32>
    %13 = arith.addf %10, %12 : vector<2x256xf32>
    %cst_11 = arith.constant 0.000000e+00 : f32
    %14 = vector.broadcast %cst_11 : f32 to vector<2x256xf32>
    %15 = arith.maximumf %13, %14 : vector<2x256xf32>
    %c0_12 = arith.constant 0 : index
    %c0_13 = arith.constant 0 : index
    %16 = vector.load %arg6[%c0_12, %c0_13] : memref<1x256xf32, #tpu.memory_space<vmem>>, vector<1x256xf32>
    %17 = vector.broadcast %16 : vector<1x256xf32> to vector<2x256xf32>
    %18 = arith.mulf %15, %17 : vector<2x256xf32>
    %cst_14 = arith.constant dense<0.000000e+00> : vector<2xf32>
    %19 = vector.multi_reduction <add>, %18, %cst_14 [1] : vector<2x256xf32> to vector<2xf32>
    %20 = vector.shape_cast %19 : vector<2xf32> to vector<2x1xf32>
    %c0_15 = arith.constant 0 : index
    %c0_16 = arith.constant 0 : index
    %21 = vector.load %arg7[%c0_15, %c0_16] : memref<1x1xf32, #tpu.memory_space<vmem>>, vector<1x1xf32>
    %22 = vector.broadcast %21 : vector<1x1xf32> to vector<2x1xf32>
    %23 = arith.addf %20, %22 : vector<2x1xf32>
    %c0_17 = arith.constant 0 : index
    %c0_18 = arith.constant 0 : index
    %24 = vector.load %arg8[%c0_17, %c0_18] : memref<2x1xf32, #tpu.memory_space<vmem>>, vector<2x1xf32>
    tpu.vector_store %arg8[%c0_17, %c0_18], %23 {strides = array<i32>} : memref<2x1xf32, #tpu.memory_space<vmem>>, vector<2x1xf32>,
    return
  }
  func.func @transform_0(%arg0: i32) -> (i32, i32) {
    %c0_i32 = arith.constant 0 : i32
    %c0_i32_0 = arith.constant 0 : i32
    %c0_i32_1 = arith.constant 0 : i32
    return %c0_i32, %c0_i32_0 : i32, i32
  }
  func.func @transform_1(%arg0: i32) -> (i32, i32) {
    %c0_i32 = arith.constant 0 : i32
    %c0_i32_0 = arith.constant 0 : i32
    %c0_i32_1 = arith.constant 0 : i32
    return %c0_i32, %c0_i32_0 : i32, i32
  }
  func.func @transform_2(%arg0: i32) -> (i32, i32) {
    %c0_i32 = arith.constant 0 : i32
    %c0_i32_0 = arith.constant 0 : i32
    %c0_i32_1 = arith.constant 0 : i32
    return %c0_i32, %c0_i32_0 : i32, i32
  }
  func.func @transform_3(%arg0: i32) -> (i32, i32) {
    %c0_i32 = arith.constant 0 : i32
    %c0_i32_0 = arith.constant 0 : i32
    %c0_i32_1 = arith.constant 0 : i32
    return %c0_i32, %c0_i32_0 : i32, i32
  }
  func.func @transform_4(%arg0: i32) -> (i32, i32) {
    %c0_i32 = arith.constant 0 : i32
    %c0_i32_0 = arith.constant 0 : i32
    %c0_i32_1 = arith.constant 0 : i32
    return %c0_i32, %c0_i32_0 : i32, i32
  }
  func.func @transform_5(%arg0: i32) -> (i32, i32) {
    %c0_i32 = arith.constant 0 : i32
    %c0_i32_0 = arith.constant 0 : i32
    %c0_i32_1 = arith.constant 0 : i32
    return %c0_i32, %c0_i32_0 : i32, i32
  }
  func.func @transform_6(%arg0: i32) -> (i32, i32) {
    %c0_i32 = arith.constant 0 : i32
    %c0_i32_0 = arith.constant 0 : i32
    %c0_i32_1 = arith.constant 0 : i32
    return %c0_i32, %c0_i32_0 : i32, i32
  }
  func.func @transform_7(%arg0: i32) -> (i32, i32) {
    %c0_i32 = arith.constant 0 : i32
    %c0_i32_0 = arith.constant 0 : i32
    %c0_i32_1 = arith.constant 0 : i32
    return %c0_i32, %c0_i32_0 : i32, i32
  }
}

</mosaic_0001>

<llo_original>
// kernel: var_forward.4
$region0: #{var_forward.4}
  #allocation0 [shape = 'u32[]', space=smem, size = 0x4, offset = 0x4, fixed_abs, tag = 'smem constant byte address 0x4 - core index']
  #allocation1 [shape = 'u32[144,128]{1,0:T(1,128)}', space=vmem, size = 0x12000, scoped, tag = 'internal scratch']
  %s0 = inlined_call_operand.vmem [shape: bf16[512,128], index: 0, kind: input, shape index: {}]
  %s1 = inlined_call_operand.vmem [shape: bf16[128,32], index: 1, kind: input, shape index: {}]
  %s2 = inlined_call_operand.vmem [shape: f32[1,32], index: 2, kind: input, shape index: {}]
  %s3 = inlined_call_operand.vmem [shape: bf16[512,32], index: 3, kind: output, shape index: {}]
  %s4 = sld [smem:[#allocation0]]
  $region45: #{var_forward.4} parent=0
    _
  %s6 = ssub.s32 1, %s4
  %s7 = scalar_select 0, %s6, %s4
  loop: start=0, step=1, limit=4
  $region2: #{var_forward.4} parent=0 // loop_pre_header
    _
  $region3: #{var_forward.4} parent=0 // loop_header
    %s9 = sphi 0, %s13
    %p10 = scmp.ge.s32.totalorder %s9, 4
    %s19 = sphi 0, %s21
    %s22 = sphi 0, %s19
    %s23 = sphi 0, %s22
    %s39 = sphi 0, %s23
    %s43 = sphi 0, %s43
    %s45 = sphi 0, %s43
    %s46 = sphi 0, %s45
    %s60 = sphi 0, %s46
    %s64 = sphi 0, %s64
    %s66 = sphi 0, %s64
    %s67 = sphi 0, %s66
    %s81 = sphi 0, %s67
    %s87 = sphi 0, %s89
    %s90 = sphi 0, %s87
    %s91 = sphi 0, %s90
    %s107 = sphi 0, %s91
  $region4: #{var_forward.4} parent=0 // loop_header_branch
    %12 = sbr.rel (%p10) target = $region8
  $region5: #{var_forward.4} parent=0 // loop_body
    %s14 = ssub.s32 %s9, 1
    %s15 = ssub.s32 %s9, 2
    %s16 = sadd.s32 %s9, 1
    %s17 = ssub.s32 %s9, %s16
    %p18 = scmp.eq.s32.totalorder %s17, 0
    %s20 = sadd.s32 %s19, 1
    %s21 = scalar_select %p18, %s19, %s20
    %p24 = pneg %p18
    %p25 = scmp.eq.s32.totalorder %s9, 1
    %p26 = por %p24, %p25
    %p27 = scmp.ne.s32.totalorder %s19, %s22
    %p28 = scmp.eq.s32.totalorder %s9, 0
    %p29 = por %p27, %p28
    %p30 = scmp.ne.s32.totalorder %s19, %s22
    %p31 = scmp.eq.s32.totalorder %s14, 1
    %p32 = por %p30, %p31
    %p33 = scmp.ne.s32.totalorder %s22, %s23
    %p34 = scmp.eq.s32.totalorder %s14, 0
    %p35 = por %p33, %p34
    %p36 = scmp.ne.s32.totalorder %s22, %s23
    %p37 = scmp.eq.s32.totalorder %s15, 1
    %p38 = por %p36, %p37
    %p40 = scmp.ne.s32.totalorder %s23, %s39
    %p41 = scmp.eq.s32.totalorder %s15, 0
    %p42 = por %p40, %p41
    %s44 = sadd.s32 %s43, 1
    %p47 = scmp.eq.s32.totalorder %s9, 1
    %p48 = scmp.ne.s32.totalorder %s43, %s45
    %p49 = scmp.eq.s32.totalorder %s9, 0
    %p50 = por %p48, %p49
    %p51 = scmp.ne.s32.totalorder %s43, %s45
    %p52 = scmp.eq.s32.totalorder %s14, 1
    %p53 = por %p51, %p52
    %p54 = scmp.ne.s32.totalorder %s45, %s46
    %p55 = scmp.eq.s32.totalorder %s14, 0
    %p56 = por %p54, %p55
    %p57 = scmp.ne.s32.totalorder %s45, %s46
    %p58 = scmp.eq.s32.totalorder %s15, 1
    %p59 = por %p57, %p58
    %p61 = scmp.ne.s32.totalorder %s46, %s60
    %p62 = scmp.eq.s32.totalorder %s15, 0
    %p63 = por %p61, %p62
    %s65 = sadd.s32 %s64, 1
    %p68 = scmp.eq.s32.totalorder %s9, 1
    %p69 = scmp.ne.s32.totalorder %s64, %s66
    %p70 = scmp.eq.s32.totalorder %s9, 0
    %p71 = por %p69, %p70
    %p72 = scmp.ne.s32.totalorder %s64, %s66
    %p73 = scmp.eq.s32.totalorder %s14, 1
    %p74 = por %p72, %p73
    %p75 = scmp.ne.s32.totalorder %s66, %s67
    %p76 = scmp.eq.s32.totalorder %s14, 0
    %p77 = por %p75, %p76
    %p78 = scmp.ne.s32.totalorder %s66, %s67
    %p79 = scmp.eq.s32.totalorder %s15, 1
    %p80 = por %p78, %p79
    %p82 = scmp.ne.s32.totalorder %s67, %s81
    %p83 = scmp.eq.s32.totalorder %s15, 0
    %p84 = por %p82, %p83
    %s85 = ssub.s32 %s9, %s16
    %p86 = scmp.eq.s32.totalorder %s85, 0
    %s88 = sadd.s32 %s87, 1
    %s89 = scalar_select %p86, %s87, %s88
    %p92 = pneg %p86
    %p93 = scmp.eq.s32.totalorder %s9, 1
    %p94 = por %p92, %p93
    %p95 = scmp.ne.s32.totalorder %s87, %s90
    %p96 = scmp.eq.s32.totalorder %s9, 0
    %p97 = por %p95, %p96
    %p98 = scmp.ne.s32.totalorder %s87, %s90
    %p99 = scmp.eq.s32.totalorder %s14, 1
    %p100 = por %p98, %p99
    %p101 = scmp.ne.s32.totalorder %s90, %s91
    %p102 = scmp.eq.s32.totalorder %s14, 0
    %p103 = por %p101, %p102
    %p104 = scmp.ne.s32.totalorder %s90, %s91
    %p105 = scmp.eq.s32.totalorder %s15, 1
    %p106 = por %p104, %p105
    %p108 = scmp.ne.s32.totalorder %s91, %s107
    %p109 = scmp.eq.s32.totalorder %s15, 0
    %p110 = por %p108, %p109
    %p111 = scmp.le.s32.totalorder 1, %s9
    %p112 = scmp.lt.s32.totalorder %s9, 3
    %p113 = pnand %p111, %p112
    %p114 = pneg %p113
    // Predicated region
    $region9: #{var_forward.4} parent=5 // pred_check
      _
    $region10: #{var_forward.4} parent=5 // pred_check_branch
      %116 = sbr.rel (%p113) target = $region12
    $region11: #{var_forward.4} parent=5 // pred_region
      %s117 = ssub.s32 %s9, 1
      // Predicated region
      $region13: #{var_forward.4} parent=11 // pred_check
        %p118 = pneg %p56
      $region14: #{var_forward.4} parent=11 // pred_check_branch
        %120 = sbr.rel (%p118) target = $region16
      $region15: #{var_forward.4} parent=11 // pred_region
        _
      $region16: #{var_forward.4} parent=11 // pred_fallthru
        _
      // Predicated region
      $region17: #{var_forward.4} parent=11 // pred_check
        %p121 = pneg %p77
      $region18: #{var_forward.4} parent=11 // pred_check_branch
        %123 = sbr.rel (%p121) target = $region20
      $region19: #{var_forward.4} parent=11 // pred_region
        _
      $region20: #{var_forward.4} parent=11 // pred_fallthru
        _
    $region12: #{var_forward.4} parent=5 // pred_fallthru
      _
    %p124 = scmp.lt.s32.totalorder %s9, 2
    // Predicated region
    $region21: #{var_forward.4} parent=5 // pred_check
      %p125 = pneg %p124
    $region22: #{var_forward.4} parent=5 // pred_check_branch
      %127 = sbr.rel (%p125) target = $region24
    $region23: #{var_forward.4} parent=5 // pred_region
      // Predicated region
      $region25: #{var_forward.4} parent=23 // pred_check
        %p128 = pneg %p29
      $region26: #{var_forward.4} parent=23 // pred_check_branch
        %130 = sbr.rel (%p128) target = $region28
      $region27: #{var_forward.4} parent=23 // pred_region
        %s131 = smul.u32 32, %s9
        %p132 = scmp.lt.s32.totalorder %s131, 63
        %s133 = scalar_select %p132, %s131, 63
        %s134 = smul.addr %s133, 4
        %s135 = scalar_lea.vmem %s0, %s134
        %s136 = smul.u32 32, %s9
      $region28: #{var_forward.4} parent=23 // pred_fallthru
        _
    $region24: #{var_forward.4} parent=5 // pred_fallthru
      _
    %p137 = scmp.le.s32.totalorder 1, %s9
    %p138 = scmp.lt.s32.totalorder %s9, 3
    %p139 = pnand %p137, %p138
    %p140 = pneg %p139
    // Predicated region
    $region29: #{var_forward.4} parent=5 // pred_check
      _
    $region30: #{var_forward.4} parent=5 // pred_check_branch
      %142 = sbr.rel (%p139) target = $region32
    $region31: #{var_forward.4} parent=5 // pred_region
      %s143 = ssub.s32 %s9, 1
      %s144 = smul.u32 32, %s14
      %p145 = scmp.lt.s32.totalorder %s144, 63
      %s146 = scalar_select %p145, %s144, 63
      %s147 = smul.addr %s146, 4
      %s148 = scalar_lea.vmem %s0, %s147
      %p149 = pneg %p35
      %p150 = pneg %p32
      %p151 = pneg %p56
      %p152 = pneg %p53
      %p153 = pneg %p77
      %p154 = pneg %p74
      %p155 = pneg %p103
      %p156 = pneg %p100
      %s157 = smul.u32 32, %s14
      %p158 = scmp.lt.s32.totalorder %s157, 63
      %s159 = scalar_select %p158, %s157, 63
      %s160 = smul.addr %s159, 4
      %s161 = scalar_lea.vmem %s3, %s160
      %s162 = smul.u32 32, %s14
      %p163 = scmp.lt.s32.totalorder %s162, 63
      %s164 = scalar_select %p163, %s162, 63
      %s165 = smul.addr %s164, 4
      %s166 = scalar_lea.vmem %s0, %s165
      %s167 = smul.u32 32, %s14
      %s168 = smul.u32 32, %s14
      %p169 = scmp.lt.s32.totalorder %s168, 63
      %s170 = scalar_select %p169, %s168, 63
      %s171 = smul.addr %s170, 4
      %s172 = scalar_lea.vmem %s3, %s171
      %s173 = smul.u32 32, %s14
      %v175 = vld [vmem:[%s166] sm:$0xf]
      %v176 = vld [vmem:[%s166 + $0x4] sm:$0xf]
      %v177 = vld [vmem:[%s166 + $0x8] sm:$0xf]
      %v178 = vld [vmem:[%s166 + $0xc] sm:$0xf]
      %v179 = vld [vmem:[%s166 + $0x10] sm:$0xf]
      %v180 = vld [vmem:[%s166 + $0x14] sm:$0xf]
      %v181 = vld [vmem:[%s166 + $0x18] sm:$0xf]
      %v182 = vld [vmem:[%s166 + $0x1c] sm:$0xf]
      %v183 = vld [vmem:[%s166 + $0x20] sm:$0xf]
      %v184 = vld [vmem:[%s166 + $0x24] sm:$0xf]
      %v185 = vld [vmem:[%s166 + $0x28] sm:$0xf]
      %v186 = vld [vmem:[%s166 + $0x2c] sm:$0xf]
      %v187 = vld [vmem:[%s166 + $0x30] sm:$0xf]
      %v188 = vld [vmem:[%s166 + $0x34] sm:$0xf]
      %v189 = vld [vmem:[%s166 + $0x38] sm:$0xf]
      %v190 = vld [vmem:[%s166 + $0x3c] sm:$0xf]
      %v191 = vld [vmem:[%s166 + $0x40] sm:$0xf]
      %v192 = vld [vmem:[%s166 + $0x44] sm:$0xf]
      %v193 = vld [vmem:[%s166 + $0x48] sm:$0xf]
      %v194 = vld [vmem:[%s166 + $0x4c] sm:$0xf]
      %v195 = vld [vmem:[%s166 + $0x50] sm:$0xf]
      %v196 = vld [vmem:[%s166 + $0x54] sm:$0xf]
      %v197 = vld [vmem:[%s166 + $0x58] sm:$0xf]
      %v198 = vld [vmem:[%s166 + $0x5c] sm:$0xf]
      %v199 = vld [vmem:[%s166 + $0x60] sm:$0xf]
      %v200 = vld [vmem:[%s166 + $0x64] sm:$0xf]
      %v201 = vld [vmem:[%s166 + $0x68] sm:$0xf]
      %v202 = vld [vmem:[%s166 + $0x6c] sm:$0xf]
      %v203 = vld [vmem:[%s166 + $0x70] sm:$0xf]
      %v204 = vld [vmem:[%s166 + $0x74] sm:$0xf]
      %v205 = vld [vmem:[%s166 + $0x78] sm:$0xf]
      %v206 = vld [vmem:[%s166 + $0x7c] sm:$0xf]
      %v207 = vld [vmem:[%s1] sm:$0xf]
      %v208 = vld [vmem:[%s1 + $0x4] sm:$0xf]
      %v209 = vld [vmem:[%s1 + $0x8] sm:$0xf]
      %v210 = vld [vmem:[%s1 + $0xc] sm:$0xf]
      %v211 = vld [vmem:[%s1 + $0x10] sm:$0xf]
      %v212 = vld [vmem:[%s1 + $0x14] sm:$0xf]
      %v213 = vld [vmem:[%s1 + $0x18] sm:$0xf]
      %v214 = vld [vmem:[%s1 + $0x1c] sm:$0xf]
      %v215 = vld [vmem:[%s1 + $0x20] sm:$0xf]
      %v216 = vld [vmem:[%s1 + $0x24] sm:$0xf]
      %v217 = vld [vmem:[%s1 + $0x28] sm:$0xf]
      %v218 = vld [vmem:[%s1 + $0x2c] sm:$0xf]
      %v219 = vld [vmem:[%s1 + $0x30] sm:$0xf]
      %v220 = vld [vmem:[%s1 + $0x34] sm:$0xf]
      %v221 = vld [vmem:[%s1 + $0x38] sm:$0xf]
      %v222 = vld [vmem:[%s1 + $0x3c] sm:$0xf]
      %v223 = vld [vmem:[%s2] sm:$0x1]
      %v225 = vlaneseq
      %v226 = vshrl.u32 %v225, 7
      %v227 = vsub.s32 0, %v226
      %v228 = vrot.slane %v223, %v227
      %v262 = vunpack.c.l.b16 %v175
      %v263 = vunpack.c.l.b16 %v176
      %v264 = vunpack.c.l.b16 %v177
      %v265 = vunpack.c.l.b16 %v178
      %v266 = vunpack.c.l.b16 %v179
      %v267 = vunpack.c.l.b16 %v180
      %v268 = vunpack.c.l.b16 %v181
      %v269 = vunpack.c.l.b16 %v182
      %v270 = vunpack.c.l.b16 %v183
      %v271 = vunpack.c.l.b16 %v184
      %v272 = vunpack.c.l.b16 %v185
      %v273 = vunpack.c.l.b16 %v186
      %v274 = vunpack.c.l.b16 %v187
      %v275 = vunpack.c.l.b16 %v188
      %v276 = vunpack.c.l.b16 %v189
      %v277 = vunpack.c.l.b16 %v190
      %v278 = vunpack.c.l.b16 %v191
      %v279 = vunpack.c.l.b16 %v192
      %v280 = vunpack.c.l.b16 %v193
      %v281 = vunpack.c.l.b16 %v194
      %v282 = vunpack.c.l.b16 %v195
      %v283 = vunpack.c.l.b16 %v196
      %v284 = vunpack.c.l.b16 %v197
      %v285 = vunpack.c.l.b16 %v198
      %v286 = vunpack.c.l.b16 %v199
      %v287 = vunpack.c.l.b16 %v200
      %v288 = vunpack.c.l.b16 %v201
      %v289 = vunpack.c.l.b16 %v202
      %v290 = vunpack.c.l.b16 %v203
      %v291 = vunpack.c.l.b16 %v204
      %v292 = vunpack.c.l.b16 %v205
      %v293 = vunpack.c.l.b16 %v206
      %v294 = vpack.c.b16 %v263, %v262
      %v295 = vpack.c.b16 %v265, %v264
      %v296 = vpack.c.b16 %v267, %v266
      %v297 = vpack.c.b16 %v269, %v268
      %v298 = vpack.c.b16 %v271, %v270
      %v299 = vpack.c.b16 %v273, %v272
      %v300 = vpack.c.b16 %v275, %v274
      %v301 = vpack.c.b16 %v277, %v276
      %v302 = vpack.c.b16 %v279, %v278
      %v303 = vpack.c.b16 %v281, %v280
      %v304 = vpack.c.b16 %v283, %v282
      %v305 = vpack.c.b16 %v285, %v284
      %v306 = vpack.c.b16 %v287, %v286
      %v307 = vpack.c.b16 %v289, %v288
      %v308 = vpack.c.b16 %v291, %v290
      %v309 = vpack.c.b16 %v293, %v292
      %v342 = vunpack.c.l.b16 %v207
      %v343 = vunpack.c.l.b16 %v208
      %v344 = vunpack.c.l.b16 %v209
      %v345 = vunpack.c.l.b16 %v210
      %v346 = vunpack.c.l.b16 %v211
      %v347 = vunpack.c.l.b16 %v212
      %v348 = vunpack.c.l.b16 %v213
      %v349 = vunpack.c.l.b16 %v214
      %v350 = vunpack.c.l.b16 %v215
      %v351 = vunpack.c.l.b16 %v216
      %v352 = vunpack.c.l.b16 %v217
      %v353 = vunpack.c.l.b16 %v218
      %v354 = vunpack.c.l.b16 %v219
      %v355 = vunpack.c.l.b16 %v220
      %v356 = vunpack.c.l.b16 %v221
      %v357 = vunpack.c.l.b16 %v222
      %v358 = vpack.c.b16 %v343, %v342
      %v359 = vpack.c.b16 %v345, %v344
      %v360 = vpack.c.b16 %v347, %v346
      %v361 = vpack.c.b16 %v349, %v348
      %v362 = vpack.c.b16 %v351, %v350
      %v363 = vpack.c.b16 %v353, %v352
      %v364 = vpack.c.b16 %v355, %v354
      %v365 = vpack.c.b16 %v357, %v356
      %374 = vmatprep.subr.bf16.mxu0 0
      %375 = vmatpush1.bf16.msra.mxu0 %v358
      %376 = vmatprep.subr.bf16.mxu0 0
      %377 = vmatpush1.bf16.msra.mxu0 %v359
      %378 = vmatprep.subr.bf16.mxu0 0
      %379 = vmatpush1.bf16.msra.mxu0 %v360
      %380 = vmatprep.subr.bf16.mxu0 0
      %381 = vmatpush1.bf16.msra.mxu0 %v361
      %382 = vmatprep.subr.bf16.mxu0 0
      %383 = vmatpush1.bf16.msra.mxu0 %v362
      %384 = vmatprep.subr.bf16.mxu0 0
      %385 = vmatpush1.bf16.msra.mxu0 %v363
      %386 = vmatprep.subr.bf16.mxu0 0
      %387 = vmatpush1.bf16.msra.mxu0 %v364
      %388 = vmatprep.subr.bf16.mxu0 0
      %389 = vmatpush1.bf16.msra.mxu0 %v365
      %390 = vmatprep.subr.bf16.mxu0 0
      %391 = vmatpush1.bf16.msra.mxu0 0
      %392 = vmatprep.subr.bf16.mxu0 0
      %393 = vmatpush1.bf16.msra.mxu0 0
      %394 = vmatprep.subr.bf16.mxu0 0
      %395 = vmatpush1.bf16.msra.mxu0 0
      %396 = vmatprep.subr.bf16.mxu0 0
      %397 = vmatpush1.bf16.msra.mxu0 0
      %398 = vmatprep.subr.bf16.mxu0 0
      %399 = vmatpush1.bf16.msra.mxu0 0
      %400 = vmatprep.subr.bf16.mxu0 0
      %401 = vmatpush1.bf16.msra.mxu0 0
      %402 = vmatprep.subr.bf16.mxu0 0
      %403 = vmatpush1.bf16.msra.mxu0 0
      %404 = vmatprep.subr.bf16.mxu0 0
      %405 = vmatpush1.bf16.msra.mxu0 0
      %406 = vmatprep.mubr.bf16.mxu0 0
      %407 = vmatmul.mubr.bf16.gmra.mrb[0].mxu0 %v294
      %v408 = vpop.f32.mrb[0].mxu0
      %v409 = vadd.f32 %v228, %v408
      %v410 = vpop.f32.mrb[0].mxu0
      %v411 = vpop.f32.mrb[0].mxu0
      %v412 = vadd.f32 %v228, %v411
      %v413 = vpop.f32.mrb[0].mxu0
      %414 = vmatprep.mubr.bf16.mxu0 0
      %415 = vmatmul.mubr.bf16.gmra.mrb[0].mxu0 %v295
      %v416 = vpop.f32.mrb[0].mxu0
      %v417 = vadd.f32 %v228, %v416
      %v418 = vpop.f32.mrb[0].mxu0
      %v419 = vpop.f32.mrb[0].mxu0
      %v420 = vadd.f32 %v228, %v419
      %v421 = vpop.f32.mrb[0].mxu0
      %422 = vmatprep.mubr.bf16.mxu0 0
      %423 = vmatmul.mubr.bf16.gmra.mrb[0].mxu0 %v296
      %v424 = vpop.f32.mrb[0].mxu0
      %v425 = vadd.f32 %v228, %v424
      %v426 = vpop.f32.mrb[0].mxu0
      %v427 = vpop.f32.mrb[0].mxu0
      %v428 = vadd.f32 %v228, %v427
      %v429 = vpop.f32.mrb[0].mxu0
      %430 = vmatprep.mubr.bf16.mxu0 0
      %431 = vmatmul.mubr.bf16.gmra.mrb[0].mxu0 %v297
      %v432 = vpop.f32.mrb[0].mxu0
      %v433 = vadd.f32 %v228, %v432
      %v434 = vpop.f32.mrb[0].mxu0
      %v435 = vpop.f32.mrb[0].mxu0
      %v436 = vadd.f32 %v228, %v435
      %v437 = vpop.f32.mrb[0].mxu0
      %438 = vmatprep.mubr.bf16.mxu0 0
      %439 = vmatmul.mubr.bf16.gmra.mrb[0].mxu0 %v298
      %v440 = vpop.f32.mrb[0].mxu0
      %v441 = vadd.f32 %v228, %v440
      %v442 = vpop.f32.mrb[0].mxu0
      %v443 = vpop.f32.mrb[0].mxu0
      %v444 = vadd.f32 %v228, %v443
      %v445 = vpop.f32.mrb[0].mxu0
      %446 = vmatprep.mubr.bf16.mxu0 0
      %447 = vmatmul.mubr.bf16.gmra.mrb[0].mxu0 %v299
      %v448 = vpop.f32.mrb[0].mxu0
      %v449 = vadd.f32 %v228, %v448
      %v450 = vpop.f32.mrb[0].mxu0
      %v451 = vpop.f32.mrb[0].mxu0
      %v452 = vadd.f32 %v228, %v451
      %v453 = vpop.f32.mrb[0].mxu0
      %454 = vmatprep.mubr.bf16.mxu0 0
      %455 = vmatmul.mubr.bf16.gmra.mrb[0].mxu0 %v300
      %v456 = vpop.f32.mrb[0].mxu0
      %v457 = vadd.f32 %v228, %v456
      %v458 = vpop.f32.mrb[0].mxu0
      %v459 = vpop.f32.mrb[0].mxu0
      %v460 = vadd.f32 %v228, %v459
      %v461 = vpop.f32.mrb[0].mxu0
      %462 = vmatprep.mubr.bf16.mxu0 0
      %463 = vmatmul.mubr.bf16.gmra.mrb[0].mxu0 %v301
      %v464 = vpop.f32.mrb[0].mxu0
      %v465 = vadd.f32 %v228, %v464
      %v466 = vpop.f32.mrb[0].mxu0
      %v467 = vpop.f32.mrb[0].mxu0
      %v468 = vadd.f32 %v228, %v467
      %v469 = vpop.f32.mrb[0].mxu0
      %470 = vmatprep.mubr.bf16.mxu0 0
      %471 = vmatmul.mubr.bf16.gmra.mrb[0].mxu0 %v302
      %v472 = vpop.f32.mrb[0].mxu0
      %v473 = vadd.f32 %v228, %v472
      %v474 = vpop.f32.mrb[0].mxu0
      %v475 = vpop.f32.mrb[0].mxu0
      %v476 = vadd.f32 %v228, %v475
      %v477 = vpop.f32.mrb[0].mxu0
      %478 = vmatprep.mubr.bf16.mxu0 0
      %479 = vmatmul.mubr.bf16.gmra.mrb[0].mxu0 %v303
      %v480 = vpop.f32.mrb[0].mxu0
      %v481 = vadd.f32 %v228, %v480
      %v482 = vpop.f32.mrb[0].mxu0
      %v483 = vpop.f32.mrb[0].mxu0
      %v484 = vadd.f32 %v228, %v483
      %v485 = vpop.f32.mrb[0].mxu0
      %486 = vmatprep.mubr.bf16.mxu0 0
      %487 = vmatmul.mubr.bf16.gmra.mrb[0].mxu0 %v304
      %v488 = vpop.f32.mrb[0].mxu0
      %v489 = vadd.f32 %v228, %v488
      %v490 = vpop.f32.mrb[0].mxu0
      %v491 = vpop.f32.mrb[0].mxu0
      %v492 = vadd.f32 %v228, %v491
      %v493 = vpop.f32.mrb[0].mxu0
      %494 = vmatprep.mubr.bf16.mxu0 0
      %495 = vmatmul.mubr.bf16.gmra.mrb[0].mxu0 %v305
      %v496 = vpop.f32.mrb[0].mxu0
      %v497 = vadd.f32 %v228, %v496
      %v498 = vpop.f32.mrb[0].mxu0
      %v499 = vpop.f32.mrb[0].mxu0
      %v500 = vadd.f32 %v228, %v499
      %v501 = vpop.f32.mrb[0].mxu0
      %502 = vmatprep.mubr.bf16.mxu0 0
      %503 = vmatmul.mubr.bf16.gmra.mrb[0].mxu0 %v306
      %v504 = vpop.f32.mrb[0].mxu0
      %v505 = vadd.f32 %v228, %v504
      %v506 = vpop.f32.mrb[0].mxu0
      %v507 = vpop.f32.mrb[0].mxu0
      %v508 = vadd.f32 %v228, %v507
      %v509 = vpop.f32.mrb[0].mxu0
      %510 = vmatprep.mubr.bf16.mxu0 0
      %511 = vmatmul.mubr.bf16.gmra.mrb[0].mxu0 %v307
      %v512 = vpop.f32.mrb[0].mxu0
      %v513 = vadd.f32 %v228, %v512
      %v514 = vpop.f32.mrb[0].mxu0
      %v515 = vpop.f32.mrb[0].mxu0
      %v516 = vadd.f32 %v228, %v515
      %v517 = vpop.f32.mrb[0].mxu0
      %518 = vmatprep.mubr.bf16.mxu0 0
      %519 = vmatmul.mubr.bf16.gmra.mrb[0].mxu0 %v308
      %v520 = vpop.f32.mrb[0].mxu0
      %v521 = vadd.f32 %v228, %v520
      %v522 = vpop.f32.mrb[0].mxu0
      %v523 = vpop.f32.mrb[0].mxu0
      %v524 = vadd.f32 %v228, %v523
      %v525 = vpop.f32.mrb[0].mxu0
      %526 = vmatprep.mubr.bf16.mxu0 0
      %527 = vmatmul.mubr.bf16.gmra.mrb[0].mxu0 %v309
      %v528 = vpop.f32.mrb[0].mxu0
      %v529 = vadd.f32 %v228, %v528
      %v530 = vpop.f32.mrb[0].mxu0
      %v531 = vpop.f32.mrb[0].mxu0
      %v532 = vadd.f32 %v228, %v531
      %v533 = vpop.f32.mrb[0].mxu0
      %534 = vdwg.mxu0
      %v535 = vmax.f32 %v409, 0.0
      %v536 = vmax.f32 %v412, 0.0
      %v537 = vmax.f32 %v417, 0.0
      %v538 = vmax.f32 %v420, 0.0
      %v539 = vmax.f32 %v425, 0.0
      %v540 = vmax.f32 %v428, 0.0
      %v541 = vmax.f32 %v433, 0.0
      %v542 = vmax.f32 %v436, 0.0
      %v543 = vmax.f32 %v441, 0.0
      %v544 = vmax.f32 %v444, 0.0
      %v545 = vmax.f32 %v449, 0.0
      %v546 = vmax.f32 %v452, 0.0
      %v547 = vmax.f32 %v457, 0.0
      %v548 = vmax.f32 %v460, 0.0
      %v549 = vmax.f32 %v465, 0.0
      %v550 = vmax.f32 %v468, 0.0
      %v551 = vmax.f32 %v473, 0.0
      %v552 = vmax.f32 %v476, 0.0
      %v553 = vmax.f32 %v481, 0.0
      %v554 = vmax.f32 %v484, 0.0
      %v555 = vmax.f32 %v489, 0.0
      %v556 = vmax.f32 %v492, 0.0
      %v557 = vmax.f32 %v497, 0.0
      %v558 = vmax.f32 %v500, 0.0
      %v559 = vmax.f32 %v505, 0.0
      %v560 = vmax.f32 %v508, 0.0
      %v561 = vmax.f32 %v513, 0.0
      %v562 = vmax.f32 %v516, 0.0
      %v563 = vmax.f32 %v521, 0.0
      %v564 = vmax.f32 %v524, 0.0
      %v565 = vmax.f32 %v529, 0.0
      %v566 = vmax.f32 %v532, 0.0
      %v567 = vpack.c.bf16 %v536, %v535
      %v568 = vpack.c.bf16 %v538, %v537
      %v569 = vpack.c.bf16 %v540, %v539
      %v570 = vpack.c.bf16 %v542, %v541
      %v571 = vpack.c.bf16 %v544, %v543
      %v572 = vpack.c.bf16 %v546, %v545
      %v573 = vpack.c.bf16 %v548, %v547
      %v574 = vpack.c.bf16 %v550, %v549
      %v575 = vpack.c.bf16 %v552, %v551
      %v576 = vpack.c.bf16 %v554, %v553
      %v577 = vpack.c.bf16 %v556, %v555
      %v578 = vpack.c.bf16 %v558, %v557
      %v579 = vpack.c.bf16 %v560, %v559
      %v580 = vpack.c.bf16 %v562, %v561
      %v581 = vpack.c.bf16 %v564, %v563
      %v582 = vpack.c.bf16 %v566, %v565
      %v599 = vunpack.c.l.b16 %v567
      %v600 = vunpack.c.h.b16 %v567
      %v601 = vunpack.c.l.b16 %v568
      %v602 = vunpack.c.h.b16 %v568
      %v603 = vunpack.c.l.b16 %v569
      %v604 = vunpack.c.h.b16 %v569
      %v605 = vunpack.c.l.b16 %v570
      %v606 = vunpack.c.h.b16 %v570
      %v607 = vunpack.c.l.b16 %v571
      %v608 = vunpack.c.h.b16 %v571
      %v609 = vunpack.c.l.b16 %v572
      %v610 = vunpack.c.h.b16 %v572
      %v611 = vunpack.c.l.b16 %v573
      %v612 = vunpack.c.h.b16 %v573
      %v613 = vunpack.c.l.b16 %v574
      %v614 = vunpack.c.h.b16 %v574
      %v615 = vunpack.c.l.b16 %v575
      %v616 = vunpack.c.h.b16 %v575
      %v617 = vunpack.c.l.b16 %v576
      %v618 = vunpack.c.h.b16 %v576
      %v619 = vunpack.c.l.b16 %v577
      %v620 = vunpack.c.h.b16 %v577
      %v621 = vunpack.c.l.b16 %v578
      %v622 = vunpack.c.h.b16 %v578
      %v623 = vunpack.c.l.b16 %v579
      %v624 = vunpack.c.h.b16 %v579
      %v625 = vunpack.c.l.b16 %v580
      %v626 = vunpack.c.h.b16 %v580
      %v627 = vunpack.c.l.b16 %v581
      %v628 = vunpack.c.h.b16 %v581
      %v629 = vunpack.c.l.b16 %v582
      %v630 = vunpack.c.h.b16 %v582
      %v631 = vpack.c.b16 %v599, %v599
      %v632 = vpack.c.b16 %v600, %v600
      %v633 = vpack.c.b16 %v601, %v601
      %v634 = vpack.c.b16 %v602, %v602
      %v635 = vpack.c.b16 %v603, %v603
      %v636 = vpack.c.b16 %v604, %v604
      %v637 = vpack.c.b16 %v605, %v605
      %v638 = vpack.c.b16 %v606, %v606
      %v639 = vpack.c.b16 %v607, %v607
      %v640 = vpack.c.b16 %v608, %v608
      %v641 = vpack.c.b16 %v609, %v609
      %v642 = vpack.c.b16 %v610, %v610
      %v643 = vpack.c.b16 %v611, %v611
      %v644 = vpack.c.b16 %v612, %v612
      %v645 = vpack.c.b16 %v613, %v613
      %v646 = vpack.c.b16 %v614, %v614
      %v647 = vpack.c.b16 %v615, %v615
      %v648 = vpack.c.b16 %v616, %v616
      %v649 = vpack.c.b16 %v617, %v617
      %v650 = vpack.c.b16 %v618, %v618
      %v651 = vpack.c.b16 %v619, %v619
      %v652 = vpack.c.b16 %v620, %v620
      %v653 = vpack.c.b16 %v621, %v621
      %v654 = vpack.c.b16 %v622, %v622
      %v655 = vpack.c.b16 %v623, %v623
      %v656 = vpack.c.b16 %v624, %v624
      %v657 = vpack.c.b16 %v625, %v625
      %v658 = vpack.c.b16 %v626, %v626
      %v659 = vpack.c.b16 %v627, %v627
      %v660 = vpack.c.b16 %v628, %v628
      %v661 = vpack.c.b16 %v629, %v629
      %v662 = vpack.c.b16 %v630, %v630
      %vm695 = vcmask 257024
      %696 = vst.msk [vmem:[%s172] sm:$0xf] %vm695, %v631
      %697 = vst.msk [vmem:[%s172 + $0x4] sm:$0xf] %vm695, %v632
      %698 = vst.msk [vmem:[%s172 + $0x8] sm:$0xf] %vm695, %v633
      %699 = vst.msk [vmem:[%s172 + $0xc] sm:$0xf] %vm695, %v634
      %700 = vst.msk [vmem:[%s172 + $0x10] sm:$0xf] %vm695, %v635
      %701 = vst.msk [vmem:[%s172 + $0x14] sm:$0xf] %vm695, %v636
      %702 = vst.msk [vmem:[%s172 + $0x18] sm:$0xf] %vm695, %v637
      %703 = vst.msk [vmem:[%s172 + $0x1c] sm:$0xf] %vm695, %v638
      %704 = vst.msk [vmem:[%s172 + $0x20] sm:$0xf] %vm695, %v639
      %705 = vst.msk [vmem:[%s172 + $0x24] sm:$0xf] %vm695, %v640
      %706 = vst.msk [vmem:[%s172 + $0x28] sm:$0xf] %vm695, %v641
      %707 = vst.msk [vmem:[%s172 + $0x2c] sm:$0xf] %vm695, %v642
      %708 = vst.msk [vmem:[%s172 + $0x30] sm:$0xf] %vm695, %v643
      %709 = vst.msk [vmem:[%s172 + $0x34] sm:$0xf] %vm695, %v644
      %710 = vst.msk [vmem:[%s172 + $0x38] sm:$0xf] %vm695, %v645
      %711 = vst.msk [vmem:[%s172 + $0x3c] sm:$0xf] %vm695, %v646
      %712 = vst.msk [vmem:[%s172 + $0x40] sm:$0xf] %vm695, %v647
      %713 = vst.msk [vmem:[%s172 + $0x44] sm:$0xf] %vm695, %v648
      %714 = vst.msk [vmem:[%s172 + $0x48] sm:$0xf] %vm695, %v649
      %715 = vst.msk [vmem:[%s172 + $0x4c] sm:$0xf] %vm695, %v650
      %716 = vst.msk [vmem:[%s172 + $0x50] sm:$0xf] %vm695, %v651
      %717 = vst.msk [vmem:[%s172 + $0x54] sm:$0xf] %vm695, %v652
      %718 = vst.msk [vmem:[%s172 + $0x58] sm:$0xf] %vm695, %v653
      %719 = vst.msk [vmem:[%s172 + $0x5c] sm:$0xf] %vm695, %v654
      %720 = vst.msk [vmem:[%s172 + $0x60] sm:$0xf] %vm695, %v655
      %721 = vst.msk [vmem:[%s172 + $0x64] sm:$0xf] %vm695, %v656
      %722 = vst.msk [vmem:[%s172 + $0x68] sm:$0xf] %vm695, %v657
      %723 = vst.msk [vmem:[%s172 + $0x6c] sm:$0xf] %vm695, %v658
      %724 = vst.msk [vmem:[%s172 + $0x70] sm:$0xf] %vm695, %v659
      %725 = vst.msk [vmem:[%s172 + $0x74] sm:$0xf] %vm695, %v660
      %726 = vst.msk [vmem:[%s172 + $0x78] sm:$0xf] %vm695, %v661
      %727 = vst.msk [vmem:[%s172 + $0x7c] sm:$0xf] %vm695, %v662
      %s728 = smul.u32 32, %s14
      %p729 = scmp.lt.s32.totalorder %s728, 63
      %s730 = scalar_select %p729, %s728, 63
      %s731 = smul.addr %s730, 4
      %s732 = scalar_lea.vmem %s3, %s731
      // Predicated region
      $region33: #{var_forward.4} parent=31 // pred_check
        %p733 = pneg %p100
      $region34: #{var_forward.4} parent=31 // pred_check_branch
        %735 = sbr.rel (%p733) target = $region36
      $region35: #{var_forward.4} parent=31 // pred_region
        %s736 = smul.u32 32, %s14
      $region36: #{var_forward.4} parent=31 // pred_fallthru
        _
    $region32: #{var_forward.4} parent=5 // pred_fallthru
      _
    %p737 = scmp.le.s32.totalorder 2, %s9
    // Predicated region
    $region37: #{var_forward.4} parent=5 // pred_check
      %p738 = pneg %p737
    $region38: #{var_forward.4} parent=5 // pred_check_branch
      %740 = sbr.rel (%p738) target = $region40
    $region39: #{var_forward.4} parent=5 // pred_region
      %s741 = ssub.s32 %s9, 2
      // Predicated region
      $region41: #{var_forward.4} parent=39 // pred_check
        %p742 = pneg %p106
      $region42: #{var_forward.4} parent=39 // pred_check_branch
        %744 = sbr.rel (%p742) target = $region44
      $region43: #{var_forward.4} parent=39 // pred_region
        %s745 = smul.u32 32, %s15
        %p746 = scmp.lt.s32.totalorder %s745, 63
        %s747 = scalar_select %p746, %s745, 63
        %s748 = smul.addr %s747, 4
        %s749 = scalar_lea.vmem %s3, %s748
      $region44: #{var_forward.4} parent=39 // pred_fallthru
        _
    $region40: #{var_forward.4} parent=5 // pred_fallthru
      _
  $region6: #{var_forward.4} parent=0 // loop_footer
    %s13 = sadd.s32 1, %s9
  $region7: #{var_forward.4} parent=0 // loop_footer_branch
    %8 = sbr.rel target = $region3
  $region8: #{var_forward.4} parent=0 // loop_exit
    _

// kernel: var_forward.5
$region0: #{var_forward.5}
  #allocation0 [shape = 'u32[]', space=smem, size = 0x4, offset = 0x4, fixed_abs, tag = 'smem constant byte address 0x4 - core index']
  #allocation1 [shape = 'u32[144,128]{1,0:T(1,128)}', space=vmem, size = 0x12000, scoped, tag = 'internal scratch']
  %s0 = inlined_call_operand.vmem [shape: bf16[128,512], index: 0, kind: input, shape index: {}]
  %s1 = inlined_call_operand.vmem [shape: bf16[512,32], index: 1, kind: input, shape index: {}]
  %s2 = inlined_call_operand.vmem [shape: f32[1,32], index: 2, kind: input, shape index: {}]
  %s3 = inlined_call_operand.vmem [shape: bf16[128,32], index: 3, kind: output, shape index: {}]
  %s4 = sld [smem:[#allocation0]]
  $region45: #{var_forward.5} parent=0
    _
  %s6 = ssub.s32 1, %s4
  %s7 = scalar_select 0, %s6, %s4
  loop: start=0, step=1, limit=4
  $region2: #{var_forward.5} parent=0 // loop_pre_header
    _
  $region3: #{var_forward.5} parent=0 // loop_header
    %s9 = sphi 0, %s13
    %p10 = scmp.ge.s32.totalorder %s9, 4
    %s19 = sphi 0, %s21
    %s22 = sphi 0, %s19
    %s23 = sphi 0, %s22
    %s39 = sphi 0, %s23
    %s43 = sphi 0, %s43
    %s45 = sphi 0, %s43
    %s46 = sphi 0, %s45
    %s60 = sphi 0, %s46
    %s64 = sphi 0, %s64
    %s66 = sphi 0, %s64
    %s67 = sphi 0, %s66
    %s81 = sphi 0, %s67
    %s87 = sphi 0, %s89
    %s90 = sphi 0, %s87
    %s91 = sphi 0, %s90
    %s107 = sphi 0, %s91
  $region4: #{var_forward.5} parent=0 // loop_header_branch
    %12 = sbr.rel (%p10) target = $region8
  $region5: #{var_forward.5} parent=0 // loop_body
    %s14 = ssub.s32 %s9, 1
    %s15 = ssub.s32 %s9, 2
    %s16 = sadd.s32 %s9, 1
    %s17 = ssub.s32 %s9, %s16
    %p18 = scmp.eq.s32.totalorder %s17, 0
    %s20 = sadd.s32 %s19, 1
    %s21 = scalar_select %p18, %s19, %s20
    %p24 = pneg %p18
    %p25 = scmp.eq.s32.totalorder %s9, 1
    %p26 = por %p24, %p25
    %p27 = scmp.ne.s32.totalorder %s19, %s22
    %p28 = scmp.eq.s32.totalorder %s9, 0
    %p29 = por %p27, %p28
    %p30 = scmp.ne.s32.totalorder %s19, %s22
    %p31 = scmp.eq.s32.totalorder %s14, 1
    %p32 = por %p30, %p31
    %p33 = scmp.ne.s32.totalorder %s22, %s23
    %p34 = scmp.eq.s32.totalorder %s14, 0
    %p35 = por %p33, %p34
    %p36 = scmp.ne.s32.totalorder %s22, %s23
    %p37 = scmp.eq.s32.totalorder %s15, 1
    %p38 = por %p36, %p37
    %p40 = scmp.ne.s32.totalorder %s23, %s39
    %p41 = scmp.eq.s32.totalorder %s15, 0
    %p42 = por %p40, %p41
    %s44 = sadd.s32 %s43, 1
    %p47 = scmp.eq.s32.totalorder %s9, 1
    %p48 = scmp.ne.s32.totalorder %s43, %s45
    %p49 = scmp.eq.s32.totalorder %s9, 0
    %p50 = por %p48, %p49
    %p51 = scmp.ne.s32.totalorder %s43, %s45
    %p52 = scmp.eq.s32.totalorder %s14, 1
    %p53 = por %p51, %p52
    %p54 = scmp.ne.s32.totalorder %s45, %s46
    %p55 = scmp.eq.s32.totalorder %s14, 0
    %p56 = por %p54, %p55
    %p57 = scmp.ne.s32.totalorder %s45, %s46
    %p58 = scmp.eq.s32.totalorder %s15, 1
    %p59 = por %p57, %p58
    %p61 = scmp.ne.s32.totalorder %s46, %s60
    %p62 = scmp.eq.s32.totalorder %s15, 0
    %p63 = por %p61, %p62
    %s65 = sadd.s32 %s64, 1
    %p68 = scmp.eq.s32.totalorder %s9, 1
    %p69 = scmp.ne.s32.totalorder %s64, %s66
    %p70 = scmp.eq.s32.totalorder %s9, 0
    %p71 = por %p69, %p70
    %p72 = scmp.ne.s32.totalorder %s64, %s66
    %p73 = scmp.eq.s32.totalorder %s14, 1
    %p74 = por %p72, %p73
    %p75 = scmp.ne.s32.totalorder %s66, %s67
    %p76 = scmp.eq.s32.totalorder %s14, 0
    %p77 = por %p75, %p76
    %p78 = scmp.ne.s32.totalorder %s66, %s67
    %p79 = scmp.eq.s32.totalorder %s15, 1
    %p80 = por %p78, %p79
    %p82 = scmp.ne.s32.totalorder %s67, %s81
    %p83 = scmp.eq.s32.totalorder %s15, 0
    %p84 = por %p82, %p83
    %s85 = ssub.s32 %s9, %s16
    %p86 = scmp.eq.s32.totalorder %s85, 0
    %s88 = sadd.s32 %s87, 1
    %s89 = scalar_select %p86, %s87, %s88
    %p92 = pneg %p86
    %p93 = scmp.eq.s32.totalorder %s9, 1
    %p94 = por %p92, %p93
    %p95 = scmp.ne.s32.totalorder %s87, %s90
    %p96 = scmp.eq.s32.totalorder %s9, 0
    %p97 = por %p95, %p96
    %p98 = scmp.ne.s32.totalorder %s87, %s90
    %p99 = scmp.eq.s32.totalorder %s14, 1
    %p100 = por %p98, %p99
    %p101 = scmp.ne.s32.totalorder %s90, %s91
    %p102 = scmp.eq.s32.totalorder %s14, 0
    %p103 = por %p101, %p102
    %p104 = scmp.ne.s32.totalorder %s90, %s91
    %p105 = scmp.eq.s32.totalorder %s15, 1
    %p106 = por %p104, %p105
    %p108 = scmp.ne.s32.totalorder %s91, %s107
    %p109 = scmp.eq.s32.totalorder %s15, 0
    %p110 = por %p108, %p109
    %p111 = scmp.le.s32.totalorder 1, %s9
    %p112 = scmp.lt.s32.totalorder %s9, 3
    %p113 = pnand %p111, %p112
    %p114 = pneg %p113
    // Predicated region
    $region9: #{var_forward.5} parent=5 // pred_check
      _
    $region10: #{var_forward.5} parent=5 // pred_check_branch
      %116 = sbr.rel (%p113) target = $region12
    $region11: #{var_forward.5} parent=5 // pred_region
      %s117 = ssub.s32 %s9, 1
      // Predicated region
      $region13: #{var_forward.5} parent=11 // pred_check
        %p118 = pneg %p56
      $region14: #{var_forward.5} parent=11 // pred_check_branch
        %120 = sbr.rel (%p118) target = $region16
      $region15: #{var_forward.5} parent=11 // pred_region
        _
      $region16: #{var_forward.5} parent=11 // pred_fallthru
        _
      // Predicated region
      $region17: #{var_forward.5} parent=11 // pred_check
        %p121 = pneg %p77
      $region18: #{var_forward.5} parent=11 // pred_check_branch
        %123 = sbr.rel (%p121) target = $region20
      $region19: #{var_forward.5} parent=11 // pred_region
        _
      $region20: #{var_forward.5} parent=11 // pred_fallthru
        _
    $region12: #{var_forward.5} parent=5 // pred_fallthru
      _
    %p124 = scmp.lt.s32.totalorder %s9, 2
    // Predicated region
    $region21: #{var_forward.5} parent=5 // pred_check
      %p125 = pneg %p124
    $region22: #{var_forward.5} parent=5 // pred_check_branch
      %127 = sbr.rel (%p125) target = $region24
    $region23: #{var_forward.5} parent=5 // pred_region
      // Predicated region
      $region25: #{var_forward.5} parent=23 // pred_check
        %p128 = pneg %p29
      $region26: #{var_forward.5} parent=23 // pred_check_branch
        %130 = sbr.rel (%p128) target = $region28
      $region27: #{var_forward.5} parent=23 // pred_region
        %s131 = smul.u32 8, %s9
        %p132 = scmp.lt.s32.totalorder %s131, 15
        %s133 = scalar_select %p132, %s131, 15
        %s134 = smul.addr %s133, 4
        %s135 = smul.addr %s134, 4
        %s136 = scalar_lea.vmem %s0, %s135
        %s137 = smul.u32 8, %s9
      $region28: #{var_forward.5} parent=23 // pred_fallthru
        _
    $region24: #{var_forward.5} parent=5 // pred_fallthru
      _
    %p138 = scmp.le.s32.totalorder 1, %s9
    %p139 = scmp.lt.s32.totalorder %s9, 3
    %p140 = pnand %p138, %p139
    %p141 = pneg %p140
    // Predicated region
    $region29: #{var_forward.5} parent=5 // pred_check
      _
    $region30: #{var_forward.5} parent=5 // pred_check_branch
      %143 = sbr.rel (%p140) target = $region32
    $region31: #{var_forward.5} parent=5 // pred_region
      %s144 = ssub.s32 %s9, 1
      %s145 = smul.u32 8, %s14
      %p146 = scmp.lt.s32.totalorder %s145, 15
      %s147 = scalar_select %p146, %s145, 15
      %s148 = smul.addr %s147, 4
      %s149 = smul.addr %s148, 4
      %s150 = scalar_lea.vmem %s0, %s149
      %p151 = pneg %p35
      %p152 = pneg %p32
      %p153 = pneg %p56
      %p154 = pneg %p53
      %p155 = pneg %p77
      %p156 = pneg %p74
      %p157 = pneg %p103
      %p158 = pneg %p100
      %s159 = smul.u32 8, %s14
      %p160 = scmp.lt.s32.totalorder %s159, 15
      %s161 = scalar_select %p160, %s159, 15
      %s162 = smul.addr %s161, 4
      %s163 = scalar_lea.vmem %s3, %s162
      %s164 = smul.u32 8, %s14
      %p165 = scmp.lt.s32.totalorder %s164, 15
      %s166 = scalar_select %p165, %s164, 15
      %s167 = smul.addr %s166, 4
      %s168 = smul.addr %s167, 4
      %s169 = scalar_lea.vmem %s0, %s168
      %s170 = smul.u32 8, %s14
      %s171 = smul.u32 8, %s14
      %p172 = scmp.lt.s32.totalorder %s171, 15
      %s173 = scalar_select %p172, %s171, 15
      %s174 = smul.addr %s173, 4
      %s175 = scalar_lea.vmem %s3, %s174
      %s176 = smul.u32 8, %s14
      %v178 = vld [vmem:[%s169] sm:$0xff]
      %v179 = vld [vmem:[%s169 + $0x8] sm:$0xff]
      %v180 = vld [vmem:[%s169 + $0x10] sm:$0xff]
      %v181 = vld [vmem:[%s169 + $0x18] sm:$0xff]
      %v182 = vld [vmem:[%s169 + $0x20] sm:$0xff]
      %v183 = vld [vmem:[%s169 + $0x28] sm:$0xff]
      %v184 = vld [vmem:[%s169 + $0x30] sm:$0xff]
      %v185 = vld [vmem:[%s169 + $0x38] sm:$0xff]
      %v186 = vld [vmem:[%s169 + $0x40] sm:$0xff]
      %v187 = vld [vmem:[%s169 + $0x48] sm:$0xff]
      %v188 = vld [vmem:[%s169 + $0x50] sm:$0xff]
      %v189 = vld [vmem:[%s169 + $0x58] sm:$0xff]
      %v190 = vld [vmem:[%s169 + $0x60] sm:$0xff]
      %v191 = vld [vmem:[%s169 + $0x68] sm:$0xff]
      %v192 = vld [vmem:[%s169 + $0x70] sm:$0xff]
      %v193 = vld [vmem:[%s169 + $0x78] sm:$0xff]
      %v194 = vld [vmem:[%s1] sm:$0xf]
      %v195 = vld [vmem:[%s1 + $0x4] sm:$0xf]
      %v196 = vld [vmem:[%s1 + $0x8] sm:$0xf]
      %v197 = vld [vmem:[%s1 + $0xc] sm:$0xf]
      %v198 = vld [vmem:[%s1 + $0x10] sm:$0xf]
      %v199 = vld [vmem:[%s1 + $0x14] sm:$0xf]
      %v200 = vld [vmem:[%s1 + $0x18] sm:$0xf]
      %v201 = vld [vmem:[%s1 + $0x1c] sm:$0xf]
      %v202 = vld [vmem:[%s1 + $0x20] sm:$0xf]
      %v203 = vld [vmem:[%s1 + $0x24] sm:$0xf]
      %v204 = vld [vmem:[%s1 + $0x28] sm:$0xf]
      %v205 = vld [vmem:[%s1 + $0x2c] sm:$0xf]
      %v206 = vld [vmem:[%s1 + $0x30] sm:$0xf]
      %v207 = vld [vmem:[%s1 + $0x34] sm:$0xf]
      %v208 = vld [vmem:[%s1 + $0x38] sm:$0xf]
      %v209 = vld [vmem:[%s1 + $0x3c] sm:$0xf]
      %v210 = vld [vmem:[%s1 + $0x40] sm:$0xf]
      %v211 = vld [vmem:[%s1 + $0x44] sm:$0xf]
      %v212 = vld [vmem:[%s1 + $0x48] sm:$0xf]
      %v213 = vld [vmem:[%s1 + $0x4c] sm:$0xf]
      %v214 = vld [vmem:[%s1 + $0x50] sm:$0xf]
      %v215 = vld [vmem:[%s1 + $0x54] sm:$0xf]
      %v216 = vld [vmem:[%s1 + $0x58] sm:$0xf]
      %v217 = vld [vmem:[%s1 + $0x5c] sm:$0xf]
      %v218 = vld [vmem:[%s1 + $0x60] sm:$0xf]
      %v219 = vld [vmem:[%s1 + $0x64] sm:$0xf]
      %v220 = vld [vmem:[%s1 + $0x68] sm:$0xf]
      %v221 = vld [vmem:[%s1 + $0x6c] sm:$0xf]
      %v222 = vld [vmem:[%s1 + $0x70] sm:$0xf]
      %v223 = vld [vmem:[%s1 + $0x74] sm:$0xf]
      %v224 = vld [vmem:[%s1 + $0x78] sm:$0xf]
      %v225 = vld [vmem:[%s1 + $0x7c] sm:$0xf]
      %v226 = vld [vmem:[%s1 + $0x80] sm:$0xf]
      %v227 = vld [vmem:[%s1 + $0x84] sm:$0xf]
      %v228 = vld [vmem:[%s1 + $0x88] sm:$0xf]
      %v229 = vld [vmem:[%s1 + $0x8c] sm:$0xf]
      %v230 = vld [vmem:[%s1 + $0x90] sm:$0xf]
      %v231 = vld [vmem:[%s1 + $0x94] sm:$0xf]
      %v232 = vld [vmem:[%s1 + $0x98] sm:$0xf]
      %v233 = vld [vmem:[%s1 + $0x9c] sm:$0xf]
      %v234 = vld [vmem:[%s1 + $0xa0] sm:$0xf]
      %v235 = vld [vmem:[%s1 + $0xa4] sm:$0xf]
      %v236 = vld [vmem:[%s1 + $0xa8] sm:$0xf]
      %v237 = vld [vmem:[%s1 + $0xac] sm:$0xf]
      %v238 = vld [vmem:[%s1 + $0xb0] sm:$0xf]
      %v239 = vld [vmem:[%s1 + $0xb4] sm:$0xf]
      %v240 = vld [vmem:[%s1 + $0xb8] sm:$0xf]
      %v241 = vld [vmem:[%s1 + $0xbc] sm:$0xf]
      %v242 = vld [vmem:[%s1 + $0xc0] sm:$0xf]
      %v243 = vld [vmem:[%s1 + $0xc4] sm:$0xf]
      %v244 = vld [vmem:[%s1 + $0xc8] sm:$0xf]
      %v245 = vld [vmem:[%s1 + $0xcc] sm:$0xf]
      %v246 = vld [vmem:[%s1 + $0xd0] sm:$0xf]
      %v247 = vld [vmem:[%s1 + $0xd4] sm:$0xf]
      %v248 = vld [vmem:[%s1 + $0xd8] sm:$0xf]
      %v249 = vld [vmem:[%s1 + $0xdc] sm:$0xf]
      %v250 = vld [vmem:[%s1 + $0xe0] sm:$0xf]
      %v251 = vld [vmem:[%s1 + $0xe4] sm:$0xf]
      %v252 = vld [vmem:[%s1 + $0xe8] sm:$0xf]
      %v253 = vld [vmem:[%s1 + $0xec] sm:$0xf]
      %v254 = vld [vmem:[%s1 + $0xf0] sm:$0xf]
      %v255 = vld [vmem:[%s1 + $0xf4] sm:$0xf]
      %v256 = vld [vmem:[%s1 + $0xf8] sm:$0xf]
      %v257 = vld [vmem:[%s1 + $0xfc] sm:$0xf]
      %v258 = vld [vmem:[%s2] sm:$0x1]
      %v260 = vlaneseq
      %v261 = vshrl.u32 %v260, 7
      %v262 = vsub.s32 0, %v261
      %v263 = vrot.slane %v258, %v262
      %v281 = vunpack.c.l.b16 %v178
      %v282 = vunpack.c.h.b16 %v178
      %v283 = vunpack.c.l.b16 %v179
      %v284 = vunpack.c.h.b16 %v179
      %v285 = vunpack.c.l.b16 %v180
      %v286 = vunpack.c.h.b16 %v180
      %v287 = vunpack.c.l.b16 %v181
      %v288 = vunpack.c.h.b16 %v181
      %v289 = vunpack.c.l.b16 %v182
      %v290 = vunpack.c.h.b16 %v182
      %v291 = vunpack.c.l.b16 %v183
      %v292 = vunpack.c.h.b16 %v183
      %v293 = vunpack.c.l.b16 %v184
      %v294 = vunpack.c.h.b16 %v184
      %v295 = vunpack.c.l.b16 %v185
      %v296 = vunpack.c.h.b16 %v185
      %v297 = vunpack.c.l.b16 %v186
      %v298 = vunpack.c.h.b16 %v186
      %v299 = vunpack.c.l.b16 %v187
      %v300 = vunpack.c.h.b16 %v187
      %v301 = vunpack.c.l.b16 %v188
      %v302 = vunpack.c.h.b16 %v188
      %v303 = vunpack.c.l.b16 %v189
      %v304 = vunpack.c.h.b16 %v189
      %v305 = vunpack.c.l.b16 %v190
      %v306 = vunpack.c.h.b16 %v190
      %v307 = vunpack.c.l.b16 %v191
      %v308 = vunpack.c.h.b16 %v191
      %v309 = vunpack.c.l.b16 %v192
      %v310 = vunpack.c.h.b16 %v192
      %v311 = vunpack.c.l.b16 %v193
      %v312 = vunpack.c.h.b16 %v193
      %v313 = vpack.c.b16 %v285, %v281
      %v314 = vpack.c.b16 %v286, %v282
      %v315 = vpack.c.b16 %v287, %v283
      %v316 = vpack.c.b16 %v288, %v284
      %v317 = vpack.c.b16 %v293, %v289
      %v318 = vpack.c.b16 %v294, %v290
      %v319 = vpack.c.b16 %v295, %v291
      %v320 = vpack.c.b16 %v296, %v292
      %v321 = vpack.c.b16 %v301, %v297
      %v322 = vpack.c.b16 %v302, %v298
      %v323 = vpack.c.b16 %v303, %v299
      %v324 = vpack.c.b16 %v304, %v300
      %v325 = vpack.c.b16 %v309, %v305
      %v326 = vpack.c.b16 %v310, %v306
      %v327 = vpack.c.b16 %v311, %v307
      %v328 = vpack.c.b16 %v312, %v308
      %v409 = vunpack.c.l.b16 %v194
      %v410 = vunpack.c.l.b16 %v195
      %v411 = vunpack.c.l.b16 %v196
      %v412 = vunpack.c.l.b16 %v197
      %v413 = vunpack.c.l.b16 %v198
      %v414 = vunpack.c.l.b16 %v199
      %v415 = vunpack.c.l.b16 %v200
      %v416 = vunpack.c.l.b16 %v201
      %v417 = vunpack.c.l.b16 %v202
      %v418 = vunpack.c.l.b16 %v203
      %v419 = vunpack.c.l.b16 %v204
      %v420 = vunpack.c.l.b16 %v205
      %v421 = vunpack.c.l.b16 %v206
      %v422 = vunpack.c.l.b16 %v207
      %v423 = vunpack.c.l.b16 %v208
      %v424 = vunpack.c.l.b16 %v209
      %v425 = vunpack.c.l.b16 %v210
      %v426 = vunpack.c.l.b16 %v211
      %v427 = vunpack.c.l.b16 %v212
      %v428 = vunpack.c.l.b16 %v213
      %v429 = vunpack.c.l.b16 %v214
      %v430 = vunpack.c.l.b16 %v215
      %v431 = vunpack.c.l.b16 %v216
      %v432 = vunpack.c.l.b16 %v217
      %v433 = vunpack.c.l.b16 %v218
      %v434 = vunpack.c.l.b16 %v219
      %v435 = vunpack.c.l.b16 %v220
      %v436 = vunpack.c.l.b16 %v221
      %v437 = vunpack.c.l.b16 %v222
      %v438 = vunpack.c.l.b16 %v223
      %v439 = vunpack.c.l.b16 %v224
      %v440 = vunpack.c.l.b16 %v225
      %v441 = vunpack.c.l.b16 %v226
      %v442 = vunpack.c.l.b16 %v227
      %v443 = vunpack.c.l.b16 %v228
      %v444 = vunpack.c.l.b16 %v229
      %v445 = vunpack.c.l.b16 %v230
      %v446 = vunpack.c.l.b16 %v231
      %v447 = vunpack.c.l.b16 %v232
      %v448 = vunpack.c.l.b16 %v233
      %v449 = vunpack.c.l.b16 %v234
      %v450 = vunpack.c.l.b16 %v235
      %v451 = vunpack.c.l.b16 %v236
      %v452 = vunpack.c.l.b16 %v237
      %v453 = vunpack.c.l.b16 %v238
      %v454 = vunpack.c.l.b16 %v239
      %v455 = vunpack.c.l.b16 %v240
      %v456 = vunpack.c.l.b16 %v241
      %v457 = vunpack.c.l.b16 %v242
      %v458 = vunpack.c.l.b16 %v243
      %v459 = vunpack.c.l.b16 %v244
      %v460 = vunpack.c.l.b16 %v245
      %v461 = vunpack.c.l.b16 %v246
      %v462 = vunpack.c.l.b16 %v247
      %v463 = vunpack.c.l.b16 %v248
      %v464 = vunpack.c.l.b16 %v249
      %v465 = vunpack.c.l.b16 %v250
      %v466 = vunpack.c.l.b16 %v251
      %v467 = vunpack.c.l.b16 %v252
      %v468 = vunpack.c.l.b16 %v253
      %v469 = vunpack.c.l.b16 %v254
      %v470 = vunpack.c.l.b16 %v255
      %v471 = vunpack.c.l.b16 %v256
      %v472 = vunpack.c.l.b16 %v257
      %v473 = vpack.c.b16 %v410, %v409
      %v474 = vpack.c.b16 %v412, %v411
      %v475 = vpack.c.b16 %v414, %v413
      %v476 = vpack.c.b16 %v416, %v415
      %v477 = vpack.c.b16 %v418, %v417
      %v478 = vpack.c.b16 %v420, %v419
      %v479 = vpack.c.b16 %v422, %v421
      %v480 = vpack.c.b16 %v424, %v423
      %v481 = vpack.c.b16 %v426, %v425
      %v482 = vpack.c.b16 %v428, %v427
      %v483 = vpack.c.b16 %v430, %v429
      %v484 = vpack.c.b16 %v432, %v431
      %v485 = vpack.c.b16 %v434, %v433
      %v486 = vpack.c.b16 %v436, %v435
      %v487 = vpack.c.b16 %v438, %v437
      %v488 = vpack.c.b16 %v440, %v439
      %v489 = vpack.c.b16 %v442, %v441
      %v490 = vpack.c.b16 %v444, %v443
      %v491 = vpack.c.b16 %v446, %v445
      %v492 = vpack.c.b16 %v448, %v447
      %v493 = vpack.c.b16 %v450, %v449
      %v494 = vpack.c.b16 %v452, %v451
      %v495 = vpack.c.b16 %v454, %v453
      %v496 = vpack.c.b16 %v456, %v455
      %v497 = vpack.c.b16 %v458, %v457
      %v498 = vpack.c.b16 %v460, %v459
      %v499 = vpack.c.b16 %v462, %v461
      %v500 = vpack.c.b16 %v464, %v463
      %v501 = vpack.c.b16 %v466, %v465
      %v502 = vpack.c.b16 %v468, %v467
      %v503 = vpack.c.b16 %v470, %v469
      %v504 = vpack.c.b16 %v472, %v471
      %537 = vmatprep.subr.bf16.mxu0 0
      %538 = vmatpush1.bf16.msra.mxu0 %v473
      %539 = vmatprep.subr.bf16.mxu0 0
      %540 = vmatpush1.bf16.msra.mxu0 %v474
      %541 = vmatprep.subr.bf16.mxu0 0
      %542 = vmatpush1.bf16.msra.mxu0 %v475
      %543 = vmatprep.subr.bf16.mxu0 0
      %544 = vmatpush1.bf16.msra.mxu0 %v476
      %545 = vmatprep.subr.bf16.mxu0 0
      %546 = vmatpush1.bf16.msra.mxu0 %v477
      %547 = vmatprep.subr.bf16.mxu0 0
      %548 = vmatpush1.bf16.msra.mxu0 %v478
      %549 = vmatprep.subr.bf16.mxu0 0
      %550 = vmatpush1.bf16.msra.mxu0 %v479
      %551 = vmatprep.subr.bf16.mxu0 0
      %552 = vmatpush1.bf16.msra.mxu0 %v480
      %553 = vmatprep.subr.bf16.mxu0 0
      %554 = vmatpush1.bf16.msra.mxu0 %v481
      %555 = vmatprep.subr.bf16.mxu0 0
      %556 = vmatpush1.bf16.msra.mxu0 %v482
      %557 = vmatprep.subr.bf16.mxu0 0
      %558 = vmatpush1.bf16.msra.mxu0 %v483
      %559 = vmatprep.subr.bf16.mxu0 0
      %560 = vmatpush1.bf16.msra.mxu0 %v484
      %561 = vmatprep.subr.bf16.mxu0 0
      %562 = vmatpush1.bf16.msra.mxu0 %v485
      %563 = vmatprep.subr.bf16.mxu0 0
      %564 = vmatpush1.bf16.msra.mxu0 %v486
      %565 = vmatprep.subr.bf16.mxu0 0
      %566 = vmatpush1.bf16.msra.mxu0 %v487
      %567 = vmatprep.subr.bf16.mxu0 0
      %568 = vmatpush1.bf16.msra.mxu0 %v488
      %569 = vmatprep.mubr.bf16.mxu0 %v314
      %570 = vmatmul.mubr.bf16.gmra.mrb[0].mxu0 %v313
      %v571 = vpop.f32.mrb[0].mxu0
      %v572 = vadd.f32 %v263, %v571
      %v573 = vpop.f32.mrb[0].mxu0
      %v574 = vpop.f32.mrb[0].mxu0
      %v575 = vadd.f32 %v263, %v574
      %v576 = vpop.f32.mrb[0].mxu0
      %577 = vmatprep.mubr.bf16.mxu0 %v318
      %578 = vmatmul.mubr.bf16.gmra.mrb[0].mxu0 %v317
      %v579 = vpop.f32.mrb[0].mxu0
      %v580 = vadd.f32 %v263, %v579
      %v581 = vpop.f32.mrb[0].mxu0
      %v582 = vpop.f32.mrb[0].mxu0
      %v583 = vadd.f32 %v263, %v582
      %v584 = vpop.f32.mrb[0].mxu0
      %585 = vmatprep.mubr.bf16.mxu0 %v322
      %586 = vmatmul.mubr.bf16.gmra.mrb[0].mxu0 %v321
      %v587 = vpop.f32.mrb[0].mxu0
      %v588 = vadd.f32 %v263, %v587
      %v589 = vpop.f32.mrb[0].mxu0
      %v590 = vpop.f32.mrb[0].mxu0
      %v591 = vadd.f32 %v263, %v590
      %v592 = vpop.f32.mrb[0].mxu0
      %593 = vmatprep.mubr.bf16.mxu0 %v326
      %594 = vmatmul.mubr.bf16.gmra.mrb[0].mxu0 %v325
      %v595 = vpop.f32.mrb[0].mxu0
      %v596 = vadd.f32 %v263, %v595
      %v597 = vpop.f32.mrb[0].mxu0
      %v598 = vpop.f32.mrb[0].mxu0
      %v599 = vadd.f32 %v263, %v598
      %v600 = vpop.f32.mrb[0].mxu0
      %601 = vdwg.mxu0
      %602 = vmatprep.subr.bf16.mxu0 0
      %603 = vmatpush1.bf16.msra.mxu0 %v489
      %604 = vmatprep.subr.bf16.mxu0 0
      %605 = vmatpush1.bf16.msra.mxu0 %v490
      %606 = vmatprep.subr.bf16.mxu0 0
      %607 = vmatpush1.bf16.msra.mxu0 %v491
      %608 = vmatprep.subr.bf16.mxu0 0
      %609 = vmatpush1.bf16.msra.mxu0 %v492
      %610 = vmatprep.subr.bf16.mxu0 0
      %611 = vmatpush1.bf16.msra.mxu0 %v493
      %612 = vmatprep.subr.bf16.mxu0 0
      %613 = vmatpush1.bf16.msra.mxu0 %v494
      %614 = vmatprep.subr.bf16.mxu0 0
      %615 = vmatpush1.bf16.msra.mxu0 %v495
      %616 = vmatprep.subr.bf16.mxu0 0
      %617 = vmatpush1.bf16.msra.mxu0 %v496
      %618 = vmatprep.subr.bf16.mxu0 0
      %619 = vmatpush1.bf16.msra.mxu0 %v497
      %620 = vmatprep.subr.bf16.mxu0 0
      %621 = vmatpush1.bf16.msra.mxu0 %v498
      %622 = vmatprep.subr.bf16.mxu0 0
      %623 = vmatpush1.bf16.msra.mxu0 %v499
      %624 = vmatprep.subr.bf16.mxu0 0
      %625 = vmatpush1.bf16.msra.mxu0 %v500
      %626 = vmatprep.subr.bf16.mxu0 0
      %627 = vmatpush1.bf16.msra.mxu0 %v501
      %628 = vmatprep.subr.bf16.mxu0 0
      %629 = vmatpush1.bf16.msra.mxu0 %v502
      %630 = vmatprep.subr.bf16.mxu0 0
      %631 = vmatpush1.bf16.msra.mxu0 %v503
      %632 = vmatprep.subr.bf16.mxu0 0
      %633 = vmatpush1.bf16.msra.mxu0 %v504
      %634 = vmatprep.mubr.bf16.mxu0 %v316
      %635 = vmatmul.mubr.bf16.gmra.mrb[0].mxu0 %v315
      %v636 = vpop.f32.mrb[0].mxu0
      %v637 = vadd.f32 %v572, %v636
      %v638 = vpop.f32.mrb[0].mxu0
      %v639 = vpop.f32.mrb[0].mxu0
      %v640 = vadd.f32 %v575, %v639
      %v641 = vpop.f32.mrb[0].mxu0
      %642 = vmatprep.mubr.bf16.mxu0 %v320
      %643 = vmatmul.mubr.bf16.gmra.mrb[0].mxu0 %v319
      %v644 = vpop.f32.mrb[0].mxu0
      %v645 = vadd.f32 %v580, %v644
      %v646 = vpop.f32.mrb[0].mxu0
      %v647 = vpop.f32.mrb[0].mxu0
      %v648 = vadd.f32 %v583, %v647
      %v649 = vpop.f32.mrb[0].mxu0
      %650 = vmatprep.mubr.bf16.mxu0 %v324
      %651 = vmatmul.mubr.bf16.gmra.mrb[0].mxu0 %v323
      %v652 = vpop.f32.mrb[0].mxu0
      %v653 = vadd.f32 %v588, %v652
      %v654 = vpop.f32.mrb[0].mxu0
      %v655 = vpop.f32.mrb[0].mxu0
      %v656 = vadd.f32 %v591, %v655
      %v657 = vpop.f32.mrb[0].mxu0
      %658 = vmatprep.mubr.bf16.mxu0 %v328
      %659 = vmatmul.mubr.bf16.gmra.mrb[0].mxu0 %v327
      %v660 = vpop.f32.mrb[0].mxu0
      %v661 = vadd.f32 %v596, %v660
      %v662 = vpop.f32.mrb[0].mxu0
      %v663 = vpop.f32.mrb[0].mxu0
      %v664 = vadd.f32 %v599, %v663
      %v665 = vpop.f32.mrb[0].mxu0
      %666 = vdwg.mxu0
      %v667 = vmax.f32 %v637, 0.0
      %v668 = vmax.f32 %v640, 0.0
      %v669 = vmax.f32 %v645, 0.0
      %v670 = vmax.f32 %v648, 0.0
      %v671 = vmax.f32 %v653, 0.0
      %v672 = vmax.f32 %v656, 0.0
      %v673 = vmax.f32 %v661, 0.0
      %v674 = vmax.f32 %v664, 0.0
      %v675 = vpack.c.bf16 %v668, %v667
      %v676 = vpack.c.bf16 %v670, %v669
      %v677 = vpack.c.bf16 %v672, %v671
      %v678 = vpack.c.bf16 %v674, %v673
      %v683 = vunpack.c.l.b16 %v675
      %v684 = vunpack.c.h.b16 %v675
      %v685 = vunpack.c.l.b16 %v676
      %v686 = vunpack.c.h.b16 %v676
      %v687 = vunpack.c.l.b16 %v677
      %v688 = vunpack.c.h.b16 %v677
      %v689 = vunpack.c.l.b16 %v678
      %v690 = vunpack.c.h.b16 %v678
      %v691 = vpack.c.b16 %v683, %v683
      %v692 = vpack.c.b16 %v684, %v684
      %v693 = vpack.c.b16 %v685, %v685
      %v694 = vpack.c.b16 %v686, %v686
      %v695 = vpack.c.b16 %v687, %v687
      %v696 = vpack.c.b16 %v688, %v688
      %v697 = vpack.c.b16 %v689, %v689
      %v698 = vpack.c.b16 %v690, %v690
      %vm707 = vcmask 257024
      %708 = vst.msk [vmem:[%s175] sm:$0xf] %vm707, %v691
      %709 = vst.msk [vmem:[%s175 + $0x4] sm:$0xf] %vm707, %v692
      %710 = vst.msk [vmem:[%s175 + $0x8] sm:$0xf] %vm707, %v693
      %711 = vst.msk [vmem:[%s175 + $0xc] sm:$0xf] %vm707, %v694
      %712 = vst.msk [vmem:[%s175 + $0x10] sm:$0xf] %vm707, %v695
      %713 = vst.msk [vmem:[%s175 + $0x14] sm:$0xf] %vm707, %v696
      %714 = vst.msk [vmem:[%s175 + $0x18] sm:$0xf] %vm707, %v697
      %715 = vst.msk [vmem:[%s175 + $0x1c] sm:$0xf] %vm707, %v698
      %s716 = smul.u32 8, %s14
      %p717 = scmp.lt.s32.totalorder %s716, 15
      %s718 = scalar_select %p717, %s716, 15
      %s719 = smul.addr %s718, 4
      %s720 = scalar_lea.vmem %s3, %s719
      // Predicated region
      $region33: #{var_forward.5} parent=31 // pred_check
        %p721 = pneg %p100
      $region34: #{var_forward.5} parent=31 // pred_check_branch
        %723 = sbr.rel (%p721) target = $region36
      $region35: #{var_forward.5} parent=31 // pred_region
        %s724 = smul.u32 8, %s14
      $region36: #{var_forward.5} parent=31 // pred_fallthru
        _
    $region32: #{var_forward.5} parent=5 // pred_fallthru
      _
    %p725 = scmp.le.s32.totalorder 2, %s9
    // Predicated region
    $region37: #{var_forward.5} parent=5 // pred_check
      %p726 = pneg %p725
    $region38: #{var_forward.5} parent=5 // pred_check_branch
      %728 = sbr.rel (%p726) target = $region40
    $region39: #{var_forward.5} parent=5 // pred_region
      %s729 = ssub.s32 %s9, 2
      // Predicated region
      $region41: #{var_forward.5} parent=39 // pred_check
        %p730 = pneg %p106
      $region42: #{var_forward.5} parent=39 // pred_check_branch
        %732 = sbr.rel (%p730) target = $region44
      $region43: #{var_forward.5} parent=39 // pred_region
        %s733 = smul.u32 8, %s15
        %p734 = scmp.lt.s32.totalorder %s733, 15
        %s735 = scalar_select %p734, %s733, 15
        %s736 = smul.addr %s735, 4
        %s737 = scalar_lea.vmem %s3, %s736
      $region44: #{var_forward.5} parent=39 // pred_fallthru
        _
    $region40: #{var_forward.5} parent=5 // pred_fallthru
      _
  $region6: #{var_forward.5} parent=0 // loop_footer
    %s13 = sadd.s32 1, %s9
  $region7: #{var_forward.5} parent=0 // loop_footer_branch
    %8 = sbr.rel target = $region3
  $region8: #{var_forward.5} parent=0 // loop_exit
    _

// kernel: var_forward.6
$region0: #{var_forward.6}
  #allocation0 [shape = 'u32[]', space=smem, size = 0x4, offset = 0x4, fixed_abs, tag = 'smem constant byte address 0x4 - core index']
  #allocation1 [shape = 'u32[144,128]{1,0:T(1,128)}', space=vmem, size = 0x12000, scoped, tag = 'internal scratch']
  %s0 = inlined_call_operand.vmem [shape: bf16[32,512], index: 0, kind: input, shape index: {}]
  %s1 = inlined_call_operand.vmem [shape: bf16[512,32], index: 1, kind: input, shape index: {}]
  %s2 = inlined_call_operand.vmem [shape: f32[1,32], index: 2, kind: input, shape index: {}]
  %s3 = inlined_call_operand.vmem [shape: bf16[32,32], index: 3, kind: output, shape index: {}]
  %s4 = sld [smem:[#allocation0]]
  $region45: #{var_forward.6} parent=0
    _
  %s6 = ssub.s32 1, %s4
  %s7 = scalar_select 0, %s6, %s4
  loop: start=0, step=1, limit=4
  $region2: #{var_forward.6} parent=0 // loop_pre_header
    _
  $region3: #{var_forward.6} parent=0 // loop_header
    %s9 = sphi 0, %s13
    %p10 = scmp.ge.s32.totalorder %s9, 4
    %s19 = sphi 0, %s21
    %s22 = sphi 0, %s19
    %s23 = sphi 0, %s22
    %s39 = sphi 0, %s23
    %s43 = sphi 0, %s43
    %s45 = sphi 0, %s43
    %s46 = sphi 0, %s45
    %s60 = sphi 0, %s46
    %s64 = sphi 0, %s64
    %s66 = sphi 0, %s64
    %s67 = sphi 0, %s66
    %s81 = sphi 0, %s67
    %s87 = sphi 0, %s89
    %s90 = sphi 0, %s87
    %s91 = sphi 0, %s90
    %s107 = sphi 0, %s91
  $region4: #{var_forward.6} parent=0 // loop_header_branch
    %12 = sbr.rel (%p10) target = $region8
  $region5: #{var_forward.6} parent=0 // loop_body
    %s14 = ssub.s32 %s9, 1
    %s15 = ssub.s32 %s9, 2
    %s16 = sadd.s32 %s9, 1
    %s17 = ssub.s32 %s9, %s16
    %p18 = scmp.eq.s32.totalorder %s17, 0
    %s20 = sadd.s32 %s19, 1
    %s21 = scalar_select %p18, %s19, %s20
    %p24 = pneg %p18
    %p25 = scmp.eq.s32.totalorder %s9, 1
    %p26 = por %p24, %p25
    %p27 = scmp.ne.s32.totalorder %s19, %s22
    %p28 = scmp.eq.s32.totalorder %s9, 0
    %p29 = por %p27, %p28
    %p30 = scmp.ne.s32.totalorder %s19, %s22
    %p31 = scmp.eq.s32.totalorder %s14, 1
    %p32 = por %p30, %p31
    %p33 = scmp.ne.s32.totalorder %s22, %s23
    %p34 = scmp.eq.s32.totalorder %s14, 0
    %p35 = por %p33, %p34
    %p36 = scmp.ne.s32.totalorder %s22, %s23
    %p37 = scmp.eq.s32.totalorder %s15, 1
    %p38 = por %p36, %p37
    %p40 = scmp.ne.s32.totalorder %s23, %s39
    %p41 = scmp.eq.s32.totalorder %s15, 0
    %p42 = por %p40, %p41
    %s44 = sadd.s32 %s43, 1
    %p47 = scmp.eq.s32.totalorder %s9, 1
    %p48 = scmp.ne.s32.totalorder %s43, %s45
    %p49 = scmp.eq.s32.totalorder %s9, 0
    %p50 = por %p48, %p49
    %p51 = scmp.ne.s32.totalorder %s43, %s45
    %p52 = scmp.eq.s32.totalorder %s14, 1
    %p53 = por %p51, %p52
    %p54 = scmp.ne.s32.totalorder %s45, %s46
    %p55 = scmp.eq.s32.totalorder %s14, 0
    %p56 = por %p54, %p55
    %p57 = scmp.ne.s32.totalorder %s45, %s46
    %p58 = scmp.eq.s32.totalorder %s15, 1
    %p59 = por %p57, %p58
    %p61 = scmp.ne.s32.totalorder %s46, %s60
    %p62 = scmp.eq.s32.totalorder %s15, 0
    %p63 = por %p61, %p62
    %s65 = sadd.s32 %s64, 1
    %p68 = scmp.eq.s32.totalorder %s9, 1
    %p69 = scmp.ne.s32.totalorder %s64, %s66
    %p70 = scmp.eq.s32.totalorder %s9, 0
    %p71 = por %p69, %p70
    %p72 = scmp.ne.s32.totalorder %s64, %s66
    %p73 = scmp.eq.s32.totalorder %s14, 1
    %p74 = por %p72, %p73
    %p75 = scmp.ne.s32.totalorder %s66, %s67
    %p76 = scmp.eq.s32.totalorder %s14, 0
    %p77 = por %p75, %p76
    %p78 = scmp.ne.s32.totalorder %s66, %s67
    %p79 = scmp.eq.s32.totalorder %s15, 1
    %p80 = por %p78, %p79
    %p82 = scmp.ne.s32.totalorder %s67, %s81
    %p83 = scmp.eq.s32.totalorder %s15, 0
    %p84 = por %p82, %p83
    %s85 = ssub.s32 %s9, %s16
    %p86 = scmp.eq.s32.totalorder %s85, 0
    %s88 = sadd.s32 %s87, 1
    %s89 = scalar_select %p86, %s87, %s88
    %p92 = pneg %p86
    %p93 = scmp.eq.s32.totalorder %s9, 1
    %p94 = por %p92, %p93
    %p95 = scmp.ne.s32.totalorder %s87, %s90
    %p96 = scmp.eq.s32.totalorder %s9, 0
    %p97 = por %p95, %p96
    %p98 = scmp.ne.s32.totalorder %s87, %s90
    %p99 = scmp.eq.s32.totalorder %s14, 1
    %p100 = por %p98, %p99
    %p101 = scmp.ne.s32.totalorder %s90, %s91
    %p102 = scmp.eq.s32.totalorder %s14, 0
    %p103 = por %p101, %p102
    %p104 = scmp.ne.s32.totalorder %s90, %s91
    %p105 = scmp.eq.s32.totalorder %s15, 1
    %p106 = por %p104, %p105
    %p108 = scmp.ne.s32.totalorder %s91, %s107
    %p109 = scmp.eq.s32.totalorder %s15, 0
    %p110 = por %p108, %p109
    %p111 = scmp.le.s32.totalorder 1, %s9
    %p112 = scmp.lt.s32.totalorder %s9, 3
    %p113 = pnand %p111, %p112
    %p114 = pneg %p113
    // Predicated region
    $region9: #{var_forward.6} parent=5 // pred_check
      _
    $region10: #{var_forward.6} parent=5 // pred_check_branch
      %116 = sbr.rel (%p113) target = $region12
    $region11: #{var_forward.6} parent=5 // pred_region
      %s117 = ssub.s32 %s9, 1
      // Predicated region
      $region13: #{var_forward.6} parent=11 // pred_check
        %p118 = pneg %p56
      $region14: #{var_forward.6} parent=11 // pred_check_branch
        %120 = sbr.rel (%p118) target = $region16
      $region15: #{var_forward.6} parent=11 // pred_region
        _
      $region16: #{var_forward.6} parent=11 // pred_fallthru
        _
      // Predicated region
      $region17: #{var_forward.6} parent=11 // pred_check
        %p121 = pneg %p77
      $region18: #{var_forward.6} parent=11 // pred_check_branch
        %123 = sbr.rel (%p121) target = $region20
      $region19: #{var_forward.6} parent=11 // pred_region
        _
      $region20: #{var_forward.6} parent=11 // pred_fallthru
        _
    $region12: #{var_forward.6} parent=5 // pred_fallthru
      _
    %p124 = scmp.lt.s32.totalorder %s9, 2
    // Predicated region
    $region21: #{var_forward.6} parent=5 // pred_check
      %p125 = pneg %p124
    $region22: #{var_forward.6} parent=5 // pred_check_branch
      %127 = sbr.rel (%p125) target = $region24
    $region23: #{var_forward.6} parent=5 // pred_region
      // Predicated region
      $region25: #{var_forward.6} parent=23 // pred_check
        %p128 = pneg %p29
      $region26: #{var_forward.6} parent=23 // pred_check_branch
        %130 = sbr.rel (%p128) target = $region28
      $region27: #{var_forward.6} parent=23 // pred_region
        %s131 = smul.u32 2, %s9
        %p132 = scmp.lt.s32.totalorder %s131, 3
        %s133 = scalar_select %p132, %s131, 3
        %s134 = smul.addr %s133, 4
        %s135 = smul.addr %s134, 4
        %s136 = scalar_lea.vmem %s0, %s135
        %s137 = smul.u32 2, %s9
      $region28: #{var_forward.6} parent=23 // pred_fallthru
        _
    $region24: #{var_forward.6} parent=5 // pred_fallthru
      _
    %p138 = scmp.le.s32.totalorder 1, %s9
    %p139 = scmp.lt.s32.totalorder %s9, 3
    %p140 = pnand %p138, %p139
    %p141 = pneg %p140
    // Predicated region
    $region29: #{var_forward.6} parent=5 // pred_check
      _
    $region30: #{var_forward.6} parent=5 // pred_check_branch
      %143 = sbr.rel (%p140) target = $region32
    $region31: #{var_forward.6} parent=5 // pred_region
      %s144 = ssub.s32 %s9, 1
      %s145 = smul.u32 2, %s14
      %p146 = scmp.lt.s32.totalorder %s145, 3
      %s147 = scalar_select %p146, %s145, 3
      %s148 = smul.addr %s147, 4
      %s149 = smul.addr %s148, 4
      %s150 = scalar_lea.vmem %s0, %s149
      %p151 = pneg %p35
      %p152 = pneg %p32
      %p153 = pneg %p56
      %p154 = pneg %p53
      %p155 = pneg %p77
      %p156 = pneg %p74
      %p157 = pneg %p103
      %p158 = pneg %p100
      %s159 = smul.u32 2, %s14
      %p160 = scmp.lt.s32.totalorder %s159, 3
      %s161 = scalar_select %p160, %s159, 3
      %s162 = smul.addr %s161, 4
      %s163 = scalar_lea.vmem %s3, %s162
      %s164 = smul.u32 2, %s14
      %p165 = scmp.lt.s32.totalorder %s164, 3
      %s166 = scalar_select %p165, %s164, 3
      %s167 = smul.addr %s166, 4
      %s168 = smul.addr %s167, 4
      %s169 = scalar_lea.vmem %s0, %s168
      %s170 = smul.u32 2, %s14
      %s171 = smul.u32 2, %s14
      %p172 = scmp.lt.s32.totalorder %s171, 3
      %s173 = scalar_select %p172, %s171, 3
      %s174 = smul.addr %s173, 4
      %s175 = scalar_lea.vmem %s3, %s174
      %s176 = smul.u32 2, %s14
      %v178 = vld [vmem:[%s169] sm:$0xff]
      %v179 = vld [vmem:[%s169 + $0x8] sm:$0xff]
      %v180 = vld [vmem:[%s169 + $0x10] sm:$0xff]
      %v181 = vld [vmem:[%s169 + $0x18] sm:$0xff]
      %v182 = vld [vmem:[%s1] sm:$0xf]
      %v183 = vld [vmem:[%s1 + $0x4] sm:$0xf]
      %v184 = vld [vmem:[%s1 + $0x8] sm:$0xf]
      %v185 = vld [vmem:[%s1 + $0xc] sm:$0xf]
      %v186 = vld [vmem:[%s1 + $0x10] sm:$0xf]
      %v187 = vld [vmem:[%s1 + $0x14] sm:$0xf]
      %v188 = vld [vmem:[%s1 + $0x18] sm:$0xf]
      %v189 = vld [vmem:[%s1 + $0x1c] sm:$0xf]
      %v190 = vld [vmem:[%s1 + $0x20] sm:$0xf]
      %v191 = vld [vmem:[%s1 + $0x24] sm:$0xf]
      %v192 = vld [vmem:[%s1 + $0x28] sm:$0xf]
      %v193 = vld [vmem:[%s1 + $0x2c] sm:$0xf]
      %v194 = vld [vmem:[%s1 + $0x30] sm:$0xf]
      %v195 = vld [vmem:[%s1 + $0x34] sm:$0xf]
      %v196 = vld [vmem:[%s1 + $0x38] sm:$0xf]
      %v197 = vld [vmem:[%s1 + $0x3c] sm:$0xf]
      %v198 = vld [vmem:[%s1 + $0x40] sm:$0xf]
      %v199 = vld [vmem:[%s1 + $0x44] sm:$0xf]
      %v200 = vld [vmem:[%s1 + $0x48] sm:$0xf]
      %v201 = vld [vmem:[%s1 + $0x4c] sm:$0xf]
      %v202 = vld [vmem:[%s1 + $0x50] sm:$0xf]
      %v203 = vld [vmem:[%s1 + $0x54] sm:$0xf]
      %v204 = vld [vmem:[%s1 + $0x58] sm:$0xf]
      %v205 = vld [vmem:[%s1 + $0x5c] sm:$0xf]
      %v206 = vld [vmem:[%s1 + $0x60] sm:$0xf]
      %v207 = vld [vmem:[%s1 + $0x64] sm:$0xf]
      %v208 = vld [vmem:[%s1 + $0x68] sm:$0xf]
      %v209 = vld [vmem:[%s1 + $0x6c] sm:$0xf]
      %v210 = vld [vmem:[%s1 + $0x70] sm:$0xf]
      %v211 = vld [vmem:[%s1 + $0x74] sm:$0xf]
      %v212 = vld [vmem:[%s1 + $0x78] sm:$0xf]
      %v213 = vld [vmem:[%s1 + $0x7c] sm:$0xf]
      %v214 = vld [vmem:[%s1 + $0x80] sm:$0xf]
      %v215 = vld [vmem:[%s1 + $0x84] sm:$0xf]
      %v216 = vld [vmem:[%s1 + $0x88] sm:$0xf]
      %v217 = vld [vmem:[%s1 + $0x8c] sm:$0xf]
      %v218 = vld [vmem:[%s1 + $0x90] sm:$0xf]
      %v219 = vld [vmem:[%s1 + $0x94] sm:$0xf]
      %v220 = vld [vmem:[%s1 + $0x98] sm:$0xf]
      %v221 = vld [vmem:[%s1 + $0x9c] sm:$0xf]
      %v222 = vld [vmem:[%s1 + $0xa0] sm:$0xf]
      %v223 = vld [vmem:[%s1 + $0xa4] sm:$0xf]
      %v224 = vld [vmem:[%s1 + $0xa8] sm:$0xf]
      %v225 = vld [vmem:[%s1 + $0xac] sm:$0xf]
      %v226 = vld [vmem:[%s1 + $0xb0] sm:$0xf]
      %v227 = vld [vmem:[%s1 + $0xb4] sm:$0xf]
      %v228 = vld [vmem:[%s1 + $0xb8] sm:$0xf]
      %v229 = vld [vmem:[%s1 + $0xbc] sm:$0xf]
      %v230 = vld [vmem:[%s1 + $0xc0] sm:$0xf]
      %v231 = vld [vmem:[%s1 + $0xc4] sm:$0xf]
      %v232 = vld [vmem:[%s1 + $0xc8] sm:$0xf]
      %v233 = vld [vmem:[%s1 + $0xcc] sm:$0xf]
      %v234 = vld [vmem:[%s1 + $0xd0] sm:$0xf]
      %v235 = vld [vmem:[%s1 + $0xd4] sm:$0xf]
      %v236 = vld [vmem:[%s1 + $0xd8] sm:$0xf]
      %v237 = vld [vmem:[%s1 + $0xdc] sm:$0xf]
      %v238 = vld [vmem:[%s1 + $0xe0] sm:$0xf]
      %v239 = vld [vmem:[%s1 + $0xe4] sm:$0xf]
      %v240 = vld [vmem:[%s1 + $0xe8] sm:$0xf]
      %v241 = vld [vmem:[%s1 + $0xec] sm:$0xf]
      %v242 = vld [vmem:[%s1 + $0xf0] sm:$0xf]
      %v243 = vld [vmem:[%s1 + $0xf4] sm:$0xf]
      %v244 = vld [vmem:[%s1 + $0xf8] sm:$0xf]
      %v245 = vld [vmem:[%s1 + $0xfc] sm:$0xf]
      %v246 = vld [vmem:[%s2] sm:$0x1]
      %v248 = vlaneseq
      %v249 = vshrl.u32 %v248, 7
      %v250 = vsub.s32 0, %v249
      %v251 = vrot.slane %v246, %v250
      %v257 = vunpack.c.l.b16 %v178
      %v258 = vunpack.c.h.b16 %v178
      %v259 = vunpack.c.l.b16 %v179
      %v260 = vunpack.c.h.b16 %v179
      %v261 = vunpack.c.l.b16 %v180
      %v262 = vunpack.c.h.b16 %v180
      %v263 = vunpack.c.l.b16 %v181
      %v264 = vunpack.c.h.b16 %v181
      %v265 = vpack.c.b16 %v261, %v257
      %v266 = vpack.c.b16 %v262, %v258
      %v267 = vpack.c.b16 %v263, %v259
      %v268 = vpack.c.b16 %v264, %v260
      %v337 = vunpack.c.l.b16 %v182
      %v338 = vunpack.c.l.b16 %v183
      %v339 = vunpack.c.l.b16 %v184
      %v340 = vunpack.c.l.b16 %v185
      %v341 = vunpack.c.l.b16 %v186
      %v342 = vunpack.c.l.b16 %v187
      %v343 = vunpack.c.l.b16 %v188
      %v344 = vunpack.c.l.b16 %v189
      %v345 = vunpack.c.l.b16 %v190
      %v346 = vunpack.c.l.b16 %v191
      %v347 = vunpack.c.l.b16 %v192
      %v348 = vunpack.c.l.b16 %v193
      %v349 = vunpack.c.l.b16 %v194
      %v350 = vunpack.c.l.b16 %v195
      %v351 = vunpack.c.l.b16 %v196
      %v352 = vunpack.c.l.b16 %v197
      %v353 = vunpack.c.l.b16 %v198
      %v354 = vunpack.c.l.b16 %v199
      %v355 = vunpack.c.l.b16 %v200
      %v356 = vunpack.c.l.b16 %v201
      %v357 = vunpack.c.l.b16 %v202
      %v358 = vunpack.c.l.b16 %v203
      %v359 = vunpack.c.l.b16 %v204
      %v360 = vunpack.c.l.b16 %v205
      %v361 = vunpack.c.l.b16 %v206
      %v362 = vunpack.c.l.b16 %v207
      %v363 = vunpack.c.l.b16 %v208
      %v364 = vunpack.c.l.b16 %v209
      %v365 = vunpack.c.l.b16 %v210
      %v366 = vunpack.c.l.b16 %v211
      %v367 = vunpack.c.l.b16 %v212
      %v368 = vunpack.c.l.b16 %v213
      %v369 = vunpack.c.l.b16 %v214
      %v370 = vunpack.c.l.b16 %v215
      %v371 = vunpack.c.l.b16 %v216
      %v372 = vunpack.c.l.b16 %v217
      %v373 = vunpack.c.l.b16 %v218
      %v374 = vunpack.c.l.b16 %v219
      %v375 = vunpack.c.l.b16 %v220
      %v376 = vunpack.c.l.b16 %v221
      %v377 = vunpack.c.l.b16 %v222
      %v378 = vunpack.c.l.b16 %v223
      %v379 = vunpack.c.l.b16 %v224
      %v380 = vunpack.c.l.b16 %v225
      %v381 = vunpack.c.l.b16 %v226
      %v382 = vunpack.c.l.b16 %v227
      %v383 = vunpack.c.l.b16 %v228
      %v384 = vunpack.c.l.b16 %v229
      %v385 = vunpack.c.l.b16 %v230
      %v386 = vunpack.c.l.b16 %v231
      %v387 = vunpack.c.l.b16 %v232
      %v388 = vunpack.c.l.b16 %v233
      %v389 = vunpack.c.l.b16 %v234
      %v390 = vunpack.c.l.b16 %v235
      %v391 = vunpack.c.l.b16 %v236
      %v392 = vunpack.c.l.b16 %v237
      %v393 = vunpack.c.l.b16 %v238
      %v394 = vunpack.c.l.b16 %v239
      %v395 = vunpack.c.l.b16 %v240
      %v396 = vunpack.c.l.b16 %v241
      %v397 = vunpack.c.l.b16 %v242
      %v398 = vunpack.c.l.b16 %v243
      %v399 = vunpack.c.l.b16 %v244
      %v400 = vunpack.c.l.b16 %v245
      %v401 = vpack.c.b16 %v338, %v337
      %v402 = vpack.c.b16 %v340, %v339
      %v403 = vpack.c.b16 %v342, %v341
      %v404 = vpack.c.b16 %v344, %v343
      %v405 = vpack.c.b16 %v346, %v345
      %v406 = vpack.c.b16 %v348, %v347
      %v407 = vpack.c.b16 %v350, %v349
      %v408 = vpack.c.b16 %v352, %v351
      %v409 = vpack.c.b16 %v354, %v353
      %v410 = vpack.c.b16 %v356, %v355
      %v411 = vpack.c.b16 %v358, %v357
      %v412 = vpack.c.b16 %v360, %v359
      %v413 = vpack.c.b16 %v362, %v361
      %v414 = vpack.c.b16 %v364, %v363
      %v415 = vpack.c.b16 %v366, %v365
      %v416 = vpack.c.b16 %v368, %v367
      %v417 = vpack.c.b16 %v370, %v369
      %v418 = vpack.c.b16 %v372, %v371
      %v419 = vpack.c.b16 %v374, %v373
      %v420 = vpack.c.b16 %v376, %v375
      %v421 = vpack.c.b16 %v378, %v377
      %v422 = vpack.c.b16 %v380, %v379
      %v423 = vpack.c.b16 %v382, %v381
      %v424 = vpack.c.b16 %v384, %v383
      %v425 = vpack.c.b16 %v386, %v385
      %v426 = vpack.c.b16 %v388, %v387
      %v427 = vpack.c.b16 %v390, %v389
      %v428 = vpack.c.b16 %v392, %v391
      %v429 = vpack.c.b16 %v394, %v393
      %v430 = vpack.c.b16 %v396, %v395
      %v431 = vpack.c.b16 %v398, %v397
      %v432 = vpack.c.b16 %v400, %v399
      %465 = vmatprep.subr.bf16.mxu0 0
      %466 = vmatpush1.bf16.msra.mxu0 %v401
      %467 = vmatprep.subr.bf16.mxu0 0
      %468 = vmatpush1.bf16.msra.mxu0 %v402
      %469 = vmatprep.subr.bf16.mxu0 0
      %470 = vmatpush1.bf16.msra.mxu0 %v403
      %471 = vmatprep.subr.bf16.mxu0 0
      %472 = vmatpush1.bf16.msra.mxu0 %v404
      %473 = vmatprep.subr.bf16.mxu0 0
      %474 = vmatpush1.bf16.msra.mxu0 %v405
      %475 = vmatprep.subr.bf16.mxu0 0
      %476 = vmatpush1.bf16.msra.mxu0 %v406
      %477 = vmatprep.subr.bf16.mxu0 0
      %478 = vmatpush1.bf16.msra.mxu0 %v407
      %479 = vmatprep.subr.bf16.mxu0 0
      %480 = vmatpush1.bf16.msra.mxu0 %v408
      %481 = vmatprep.subr.bf16.mxu0 0
      %482 = vmatpush1.bf16.msra.mxu0 %v409
      %483 = vmatprep.subr.bf16.mxu0 0
      %484 = vmatpush1.bf16.msra.mxu0 %v410
      %485 = vmatprep.subr.bf16.mxu0 0
      %486 = vmatpush1.bf16.msra.mxu0 %v411
      %487 = vmatprep.subr.bf16.mxu0 0
      %488 = vmatpush1.bf16.msra.mxu0 %v412
      %489 = vmatprep.subr.bf16.mxu0 0
      %490 = vmatpush1.bf16.msra.mxu0 %v413
      %491 = vmatprep.subr.bf16.mxu0 0
      %492 = vmatpush1.bf16.msra.mxu0 %v414
      %493 = vmatprep.subr.bf16.mxu0 0
      %494 = vmatpush1.bf16.msra.mxu0 %v415
      %495 = vmatprep.subr.bf16.mxu0 0
      %496 = vmatpush1.bf16.msra.mxu0 %v416
      %497 = vmatprep.mubr.bf16.mxu0 %v266
      %498 = vmatmul.mubr.bf16.gmra.mrb[0].mxu0 %v265
      %v499 = vpop.f32.mrb[0].mxu0
      %v500 = vadd.f32 %v251, %v499
      %v501 = vpop.f32.mrb[0].mxu0
      %v502 = vpop.f32.mrb[0].mxu0
      %v503 = vadd.f32 %v251, %v502
      %v504 = vpop.f32.mrb[0].mxu0
      %505 = vdwg.mxu0
      %506 = vmatprep.subr.bf16.mxu0 0
      %507 = vmatpush1.bf16.msra.mxu0 %v417
      %508 = vmatprep.subr.bf16.mxu0 0
      %509 = vmatpush1.bf16.msra.mxu0 %v418
      %510 = vmatprep.subr.bf16.mxu0 0
      %511 = vmatpush1.bf16.msra.mxu0 %v419
      %512 = vmatprep.subr.bf16.mxu0 0
      %513 = vmatpush1.bf16.msra.mxu0 %v420
      %514 = vmatprep.subr.bf16.mxu0 0
      %515 = vmatpush1.bf16.msra.mxu0 %v421
      %516 = vmatprep.subr.bf16.mxu0 0
      %517 = vmatpush1.bf16.msra.mxu0 %v422
      %518 = vmatprep.subr.bf16.mxu0 0
      %519 = vmatpush1.bf16.msra.mxu0 %v423
      %520 = vmatprep.subr.bf16.mxu0 0
      %521 = vmatpush1.bf16.msra.mxu0 %v424
      %522 = vmatprep.subr.bf16.mxu0 0
      %523 = vmatpush1.bf16.msra.mxu0 %v425
      %524 = vmatprep.subr.bf16.mxu0 0
      %525 = vmatpush1.bf16.msra.mxu0 %v426
      %526 = vmatprep.subr.bf16.mxu0 0
      %527 = vmatpush1.bf16.msra.mxu0 %v427
      %528 = vmatprep.subr.bf16.mxu0 0
      %529 = vmatpush1.bf16.msra.mxu0 %v428
      %530 = vmatprep.subr.bf16.mxu0 0
      %531 = vmatpush1.bf16.msra.mxu0 %v429
      %532 = vmatprep.subr.bf16.mxu0 0
      %533 = vmatpush1.bf16.msra.mxu0 %v430
      %534 = vmatprep.subr.bf16.mxu0 0
      %535 = vmatpush1.bf16.msra.mxu0 %v431
      %536 = vmatprep.subr.bf16.mxu0 0
      %537 = vmatpush1.bf16.msra.mxu0 %v432
      %538 = vmatprep.mubr.bf16.mxu0 %v268
      %539 = vmatmul.mubr.bf16.gmra.mrb[0].mxu0 %v267
      %v540 = vpop.f32.mrb[0].mxu0
      %v541 = vadd.f32 %v500, %v540
      %v542 = vpop.f32.mrb[0].mxu0
      %v543 = vpop.f32.mrb[0].mxu0
      %v544 = vadd.f32 %v503, %v543
      %v545 = vpop.f32.mrb[0].mxu0
      %546 = vdwg.mxu0
      %v547 = vmax.f32 %v541, 0.0
      %v548 = vmax.f32 %v544, 0.0
      %v549 = vpack.c.bf16 %v548, %v547
      %v551 = vunpack.c.l.b16 %v549
      %v552 = vunpack.c.h.b16 %v549
      %v553 = vpack.c.b16 %v551, %v551
      %v554 = vpack.c.b16 %v552, %v552
      %vm557 = vcmask 257024
      %558 = vst.msk [vmem:[%s175] sm:$0xf] %vm557, %v553
      %559 = vst.msk [vmem:[%s175 + $0x4] sm:$0xf] %vm557, %v554
      %s560 = smul.u32 2, %s14
      %p561 = scmp.lt.s32.totalorder %s560, 3
      %s562 = scalar_select %p561, %s560, 3
      %s563 = smul.addr %s562, 4
      %s564 = scalar_lea.vmem %s3, %s563
      // Predicated region
      $region33: #{var_forward.6} parent=31 // pred_check
        %p565 = pneg %p100
      $region34: #{var_forward.6} parent=31 // pred_check_branch
        %567 = sbr.rel (%p565) target = $region36
      $region35: #{var_forward.6} parent=31 // pred_region
        %s568 = smul.u32 2, %s14
      $region36: #{var_forward.6} parent=31 // pred_fallthru
        _
    $region32: #{var_forward.6} parent=5 // pred_fallthru
      _
    %p569 = scmp.le.s32.totalorder 2, %s9
    // Predicated region
    $region37: #{var_forward.6} parent=5 // pred_check
      %p570 = pneg %p569
    $region38: #{var_forward.6} parent=5 // pred_check_branch
      %572 = sbr.rel (%p570) target = $region40
    $region39: #{var_forward.6} parent=5 // pred_region
      %s573 = ssub.s32 %s9, 2
      // Predicated region
      $region41: #{var_forward.6} parent=39 // pred_check
        %p574 = pneg %p106
      $region42: #{var_forward.6} parent=39 // pred_check_branch
        %576 = sbr.rel (%p574) target = $region44
      $region43: #{var_forward.6} parent=39 // pred_region
        %s577 = smul.u32 2, %s15
        %p578 = scmp.lt.s32.totalorder %s577, 3
        %s579 = scalar_select %p578, %s577, 3
        %s580 = smul.addr %s579, 4
        %s581 = scalar_lea.vmem %s3, %s580
      $region44: #{var_forward.6} parent=39 // pred_fallthru
        _
    $region40: #{var_forward.6} parent=5 // pred_fallthru
      _
  $region6: #{var_forward.6} parent=0 // loop_footer
    %s13 = sadd.s32 1, %s9
  $region7: #{var_forward.6} parent=0 // loop_footer_branch
    %8 = sbr.rel target = $region3
  $region8: #{var_forward.6} parent=0 // loop_exit
    _

// kernel: var_forward.7
$region0: #{var_forward.7}
  #allocation0 [shape = 'u32[]', space=smem, size = 0x4, offset = 0x4, fixed_abs, tag = 'smem constant byte address 0x4 - core index']
  #allocation1 [shape = 'u32[144,128]{1,0:T(1,128)}', space=vmem, size = 0x12000, scoped, tag = 'internal scratch']
  #allocation2 [shape = 'f32[1,1]{1,0:T(1,128)S(1)}', space=vmem, size = 0x200, scoped, tag = 'scoped memory for var_forward.7']
  %s0 = inlined_call_operand.vmem [shape: bf16[2,512], index: 0, kind: input, shape index: {}]
  %s1 = inlined_call_operand.vmem [shape: bf16[512,256], index: 1, kind: input, shape index: {}]
  %s2 = inlined_call_operand.vmem [shape: f32[1,256], index: 2, kind: input, shape index: {}]
  %s3 = inlined_call_operand.vmem [shape: bf16[256,256], index: 3, kind: input, shape index: {}]
  %s4 = inlined_call_operand.vmem [shape: f32[1,256], index: 4, kind: input, shape index: {}]
  %s5 = inlined_call_operand.vmem [shape: f32[1,256], index: 5, kind: input, shape index: {}]
  %s6 = inlined_call_operand.<no memory space> [shape: f32[1,1], index: 6, kind: input, shape index: {}]
  %s7 = inlined_call_operand.vmem [shape: f32[2,1], index: 7, kind: output, shape index: {}]
  %s8 = sld [smem:[#allocation0]]
  $region38: #{var_forward.7} parent=0
    _
  %s10 = ssub.s32 1, %s8
  %s11 = scalar_select 0, %s10, %s8
  %v12 = vstv %s6
  %13 = vst [vmem:[#allocation2] sm:$0x1] %v12
  // Predicated region
  $region2: #{var_forward.7} parent=0 // pred_check
    _
  $region3: #{var_forward.7} parent=0 // pred_check_branch
    %15 = sbr.rel (0) target = $region5
  $region4: #{var_forward.7} parent=0 // pred_region
    _
  $region5: #{var_forward.7} parent=0 // pred_fallthru
    _
  // Predicated region
  $region6: #{var_forward.7} parent=0 // pred_check
    _
  $region7: #{var_forward.7} parent=0 // pred_check_branch
    %17 = sbr.rel (0) target = $region9
  $region8: #{var_forward.7} parent=0 // pred_region
    _
  $region9: #{var_forward.7} parent=0 // pred_fallthru
    _
  // Predicated region
  $region10: #{var_forward.7} parent=0 // pred_check
    _
  $region11: #{var_forward.7} parent=0 // pred_check_branch
    %19 = sbr.rel (0) target = $region13
  $region12: #{var_forward.7} parent=0 // pred_region
    _
  $region13: #{var_forward.7} parent=0 // pred_fallthru
    _
  // Predicated region
  $region14: #{var_forward.7} parent=0 // pred_check
    _
  $region15: #{var_forward.7} parent=0 // pred_check_branch
    %21 = sbr.rel (0) target = $region17
  $region16: #{var_forward.7} parent=0 // pred_region
    _
  $region17: #{var_forward.7} parent=0 // pred_fallthru
    _
  // Predicated region
  $region18: #{var_forward.7} parent=0 // pred_check
    _
  $region19: #{var_forward.7} parent=0 // pred_check_branch
    %23 = sbr.rel (0) target = $region21
  $region20: #{var_forward.7} parent=0 // pred_region
    _
  $region21: #{var_forward.7} parent=0 // pred_fallthru
    _
  // Predicated region
  $region22: #{var_forward.7} parent=0 // pred_check
    _
  $region23: #{var_forward.7} parent=0 // pred_check_branch
    %25 = sbr.rel (0) target = $region25
  $region24: #{var_forward.7} parent=0 // pred_region
    _
  $region25: #{var_forward.7} parent=0 // pred_fallthru
    _
  // Predicated region
  $region26: #{var_forward.7} parent=0 // pred_check
    _
  $region27: #{var_forward.7} parent=0 // pred_check_branch
    %27 = sbr.rel (0) target = $region29
  $region28: #{var_forward.7} parent=0 // pred_region
    _
  $region29: #{var_forward.7} parent=0 // pred_fallthru
    _
  %v28 = vld [vmem:[%s0] sm:$0xf]
  %v29 = vld [vmem:[%s1] sm:$0xff]
  %v30 = vld [vmem:[%s1 + $0x8] sm:$0xff]
  %v31 = vld [vmem:[%s1 + $0x10] sm:$0xff]
  %v32 = vld [vmem:[%s1 + $0x18] sm:$0xff]
  %v33 = vld [vmem:[%s1 + $0x20] sm:$0xff]
  %v34 = vld [vmem:[%s1 + $0x28] sm:$0xff]
  %v35 = vld [vmem:[%s1 + $0x30] sm:$0xff]
  %v36 = vld [vmem:[%s1 + $0x38] sm:$0xff]
  %v37 = vld [vmem:[%s1 + $0x40] sm:$0xff]
  %v38 = vld [vmem:[%s1 + $0x48] sm:$0xff]
  %v39 = vld [vmem:[%s1 + $0x50] sm:$0xff]
  %v40 = vld [vmem:[%s1 + $0x58] sm:$0xff]
  %v41 = vld [vmem:[%s1 + $0x60] sm:$0xff]
  %v42 = vld [vmem:[%s1 + $0x68] sm:$0xff]
  %v43 = vld [vmem:[%s1 + $0x70] sm:$0xff]
  %v44 = vld [vmem:[%s1 + $0x78] sm:$0xff]
  %v45 = vld [vmem:[%s1 + $0x80] sm:$0xff]
  %v46 = vld [vmem:[%s1 + $0x88] sm:$0xff]
  %v47 = vld [vmem:[%s1 + $0x90] sm:$0xff]
  %v48 = vld [vmem:[%s1 + $0x98] sm:$0xff]
  %v49 = vld [vmem:[%s1 + $0xa0] sm:$0xff]
  %v50 = vld [vmem:[%s1 + $0xa8] sm:$0xff]
  %v51 = vld [vmem:[%s1 + $0xb0] sm:$0xff]
  %v52 = vld [vmem:[%s1 + $0xb8] sm:$0xff]
  %v53 = vld [vmem:[%s1 + $0xc0] sm:$0xff]
  %v54 = vld [vmem:[%s1 + $0xc8] sm:$0xff]
  %v55 = vld [vmem:[%s1 + $0xd0] sm:$0xff]
  %v56 = vld [vmem:[%s1 + $0xd8] sm:$0xff]
  %v57 = vld [vmem:[%s1 + $0xe0] sm:$0xff]
  %v58 = vld [vmem:[%s1 + $0xe8] sm:$0xff]
  %v59 = vld [vmem:[%s1 + $0xf0] sm:$0xff]
  %v60 = vld [vmem:[%s1 + $0xf8] sm:$0xff]
  %v61 = vld [vmem:[%s1 + $0x100] sm:$0xff]
  %v62 = vld [vmem:[%s1 + $0x108] sm:$0xff]
  %v63 = vld [vmem:[%s1 + $0x110] sm:$0xff]
  %v64 = vld [vmem:[%s1 + $0x118] sm:$0xff]
  %v65 = vld [vmem:[%s1 + $0x120] sm:$0xff]
  %v66 = vld [vmem:[%s1 + $0x128] sm:$0xff]
  %v67 = vld [vmem:[%s1 + $0x130] sm:$0xff]
  %v68 = vld [vmem:[%s1 + $0x138] sm:$0xff]
  %v69 = vld [vmem:[%s1 + $0x140] sm:$0xff]
  %v70 = vld [vmem:[%s1 + $0x148] sm:$0xff]
  %v71 = vld [vmem:[%s1 + $0x150] sm:$0xff]
  %v72 = vld [vmem:[%s1 + $0x158] sm:$0xff]
  %v73 = vld [vmem:[%s1 + $0x160] sm:$0xff]
  %v74 = vld [vmem:[%s1 + $0x168] sm:$0xff]
  %v75 = vld [vmem:[%s1 + $0x170] sm:$0xff]
  %v76 = vld [vmem:[%s1 + $0x178] sm:$0xff]
  %v77 = vld [vmem:[%s1 + $0x180] sm:$0xff]
  %v78 = vld [vmem:[%s1 + $0x188] sm:$0xff]
  %v79 = vld [vmem:[%s1 + $0x190] sm:$0xff]
  %v80 = vld [vmem:[%s1 + $0x198] sm:$0xff]
  %v81 = vld [vmem:[%s1 + $0x1a0] sm:$0xff]
  %v82 = vld [vmem:[%s1 + $0x1a8] sm:$0xff]
  %v83 = vld [vmem:[%s1 + $0x1b0] sm:$0xff]
  %v84 = vld [vmem:[%s1 + $0x1b8] sm:$0xff]
  %v85 = vld [vmem:[%s1 + $0x1c0] sm:$0xff]
  %v86 = vld [vmem:[%s1 + $0x1c8] sm:$0xff]
  %v87 = vld [vmem:[%s1 + $0x1d0] sm:$0xff]
  %v88 = vld [vmem:[%s1 + $0x1d8] sm:$0xff]
  %v89 = vld [vmem:[%s1 + $0x1e0] sm:$0xff]
  %v90 = vld [vmem:[%s1 + $0x1e8] sm:$0xff]
  %v91 = vld [vmem:[%s1 + $0x1f0] sm:$0xff]
  %v92 = vld [vmem:[%s1 + $0x1f8] sm:$0xff]
  %v93 = vld [vmem:[%s2] sm:$0x3]
  %v95 = vlaneseq
  %v96 = vshrl.u32 %v95, 7
  %v97 = vsub.s32 0, %v96
  %v98 = vrot.slane %v93, %v97
  %v99 = vlaneseq
  %v100 = vshrl.u32 %v99, 7
  %v101 = vsub.s32 1, %v100
  %v102 = vrot.slane %v93, %v101
  %v107 = vunpack.c.l.s4 1966171168
  %v108 = vunpack.c.0.s8 %v107
  %v109 = vlaneseq
  %v110 = vshrl.u32 %v109, 7
  %v111 = vsub.s32 %v108, %v110
  %v112 = vrot.slane %v28, %v111
  %v113 = vcombine.high %v112, %v112
  %v115 = vunpack.c.l.s4 1966171168
  %v116 = vunpack.c.0.s8 %v115
  %v117 = vlaneseq
  %v118 = vshrl.u32 %v117, 7
  %v119 = vsub.s32 %v116, %v118
  %v120 = vrot.slane %v112, %v119
  %v122 = vunpack.c.l.s4 1966171168
  %v123 = vunpack.c.0.s8 %v122
  %v124 = vlaneseq
  %v125 = vshrl.u32 %v124, 7
  %v126 = vsub.s32 %v123, %v125
  %v127 = vrot.slane %v113, %v126
  %v128 = vcombine.high %v120, %v120
  %v129 = vcombine.high %v127, %v127
  %v198 = vunpack.c.l.b16 %v29
  %v199 = vunpack.c.h.b16 %v29
  %v200 = vunpack.c.l.b16 %v30
  %v201 = vunpack.c.h.b16 %v30
  %v202 = vunpack.c.l.b16 %v31
  %v203 = vunpack.c.h.b16 %v31
  %v204 = vunpack.c.l.b16 %v32
  %v205 = vunpack.c.h.b16 %v32
  %v206 = vunpack.c.l.b16 %v33
  %v207 = vunpack.c.h.b16 %v33
  %v208 = vunpack.c.l.b16 %v34
  %v209 = vunpack.c.h.b16 %v34
  %v210 = vunpack.c.l.b16 %v35
  %v211 = vunpack.c.h.b16 %v35
  %v212 = vunpack.c.l.b16 %v36
  %v213 = vunpack.c.h.b16 %v36
  %v214 = vunpack.c.l.b16 %v37
  %v215 = vunpack.c.h.b16 %v37
  %v216 = vunpack.c.l.b16 %v38
  %v217 = vunpack.c.h.b16 %v38
  %v218 = vunpack.c.l.b16 %v39
  %v219 = vunpack.c.h.b16 %v39
  %v220 = vunpack.c.l.b16 %v40
  %v221 = vunpack.c.h.b16 %v40
  %v222 = vunpack.c.l.b16 %v41
  %v223 = vunpack.c.h.b16 %v41
  %v224 = vunpack.c.l.b16 %v42
  %v225 = vunpack.c.h.b16 %v42
  %v226 = vunpack.c.l.b16 %v43
  %v227 = vunpack.c.h.b16 %v43
  %v228 = vunpack.c.l.b16 %v44
  %v229 = vunpack.c.h.b16 %v44
  %v230 = vunpack.c.l.b16 %v45
  %v231 = vunpack.c.h.b16 %v45
  %v232 = vunpack.c.l.b16 %v46
  %v233 = vunpack.c.h.b16 %v46
  %v234 = vunpack.c.l.b16 %v47
  %v235 = vunpack.c.h.b16 %v47
  %v236 = vunpack.c.l.b16 %v48
  %v237 = vunpack.c.h.b16 %v48
  %v238 = vunpack.c.l.b16 %v49
  %v239 = vunpack.c.h.b16 %v49
  %v240 = vunpack.c.l.b16 %v50
  %v241 = vunpack.c.h.b16 %v50
  %v242 = vunpack.c.l.b16 %v51
  %v243 = vunpack.c.h.b16 %v51
  %v244 = vunpack.c.l.b16 %v52
  %v245 = vunpack.c.h.b16 %v52
  %v246 = vunpack.c.l.b16 %v53
  %v247 = vunpack.c.h.b16 %v53
  %v248 = vunpack.c.l.b16 %v54
  %v249 = vunpack.c.h.b16 %v54
  %v250 = vunpack.c.l.b16 %v55
  %v251 = vunpack.c.h.b16 %v55
  %v252 = vunpack.c.l.b16 %v56
  %v253 = vunpack.c.h.b16 %v56
  %v254 = vunpack.c.l.b16 %v57
  %v255 = vunpack.c.h.b16 %v57
  %v256 = vunpack.c.l.b16 %v58
  %v257 = vunpack.c.h.b16 %v58
  %v258 = vunpack.c.l.b16 %v59
  %v259 = vunpack.c.h.b16 %v59
  %v260 = vunpack.c.l.b16 %v60
  %v261 = vunpack.c.h.b16 %v60
  %v262 = vunpack.c.l.b16 %v61
  %v263 = vunpack.c.h.b16 %v61
  %v264 = vunpack.c.l.b16 %v62
  %v265 = vunpack.c.h.b16 %v62
  %v266 = vunpack.c.l.b16 %v63
  %v267 = vunpack.c.h.b16 %v63
  %v268 = vunpack.c.l.b16 %v64
  %v269 = vunpack.c.h.b16 %v64
  %v270 = vunpack.c.l.b16 %v65
  %v271 = vunpack.c.h.b16 %v65
  %v272 = vunpack.c.l.b16 %v66
  %v273 = vunpack.c.h.b16 %v66
  %v274 = vunpack.c.l.b16 %v67
  %v275 = vunpack.c.h.b16 %v67
  %v276 = vunpack.c.l.b16 %v68
  %v277 = vunpack.c.h.b16 %v68
  %v278 = vunpack.c.l.b16 %v69
  %v279 = vunpack.c.h.b16 %v69
  %v280 = vunpack.c.l.b16 %v70
  %v281 = vunpack.c.h.b16 %v70
  %v282 = vunpack.c.l.b16 %v71
  %v283 = vunpack.c.h.b16 %v71
  %v284 = vunpack.c.l.b16 %v72
  %v285 = vunpack.c.h.b16 %v72
  %v286 = vunpack.c.l.b16 %v73
  %v287 = vunpack.c.h.b16 %v73
  %v288 = vunpack.c.l.b16 %v74
  %v289 = vunpack.c.h.b16 %v74
  %v290 = vunpack.c.l.b16 %v75
  %v291 = vunpack.c.h.b16 %v75
  %v292 = vunpack.c.l.b16 %v76
  %v293 = vunpack.c.h.b16 %v76
  %v294 = vunpack.c.l.b16 %v77
  %v295 = vunpack.c.h.b16 %v77
  %v296 = vunpack.c.l.b16 %v78
  %v297 = vunpack.c.h.b16 %v78
  %v298 = vunpack.c.l.b16 %v79
  %v299 = vunpack.c.h.b16 %v79
  %v300 = vunpack.c.l.b16 %v80
  %v301 = vunpack.c.h.b16 %v80
  %v302 = vunpack.c.l.b16 %v81
  %v303 = vunpack.c.h.b16 %v81
  %v304 = vunpack.c.l.b16 %v82
  %v305 = vunpack.c.h.b16 %v82
  %v306 = vunpack.c.l.b16 %v83
  %v307 = vunpack.c.h.b16 %v83
  %v308 = vunpack.c.l.b16 %v84
  %v309 = vunpack.c.h.b16 %v84
  %v310 = vunpack.c.l.b16 %v85
  %v311 = vunpack.c.h.b16 %v85
  %v312 = vunpack.c.l.b16 %v86
  %v313 = vunpack.c.h.b16 %v86
  %v314 = vunpack.c.l.b16 %v87
  %v315 = vunpack.c.h.b16 %v87
  %v316 = vunpack.c.l.b16 %v88
  %v317 = vunpack.c.h.b16 %v88
  %v318 = vunpack.c.l.b16 %v89
  %v319 = vunpack.c.h.b16 %v89
  %v320 = vunpack.c.l.b16 %v90
  %v321 = vunpack.c.h.b16 %v90
  %v322 = vunpack.c.l.b16 %v91
  %v323 = vunpack.c.h.b16 %v91
  %v324 = vunpack.c.l.b16 %v92
  %v325 = vunpack.c.h.b16 %v92
  %v326 = vpack.c.b16 %v200, %v198
  %v327 = vpack.c.b16 %v201, %v199
  %v328 = vpack.c.b16 %v204, %v202
  %v329 = vpack.c.b16 %v205, %v203
  %v330 = vpack.c.b16 %v208, %v206
  %v331 = vpack.c.b16 %v209, %v207
  %v332 = vpack.c.b16 %v212, %v210
  %v333 = vpack.c.b16 %v213, %v211
  %v334 = vpack.c.b16 %v216, %v214
  %v335 = vpack.c.b16 %v217, %v215
  %v336 = vpack.c.b16 %v220, %v218
  %v337 = vpack.c.b16 %v221, %v219
  %v338 = vpack.c.b16 %v224, %v222
  %v339 = vpack.c.b16 %v225, %v223
  %v340 = vpack.c.b16 %v228, %v226
  %v341 = vpack.c.b16 %v229, %v227
  %v342 = vpack.c.b16 %v232, %v230
  %v343 = vpack.c.b16 %v233, %v231
  %v344 = vpack.c.b16 %v236, %v234
  %v345 = vpack.c.b16 %v237, %v235
  %v346 = vpack.c.b16 %v240, %v238
  %v347 = vpack.c.b16 %v241, %v239
  %v348 = vpack.c.b16 %v244, %v242
  %v349 = vpack.c.b16 %v245, %v243
  %v350 = vpack.c.b16 %v248, %v246
  %v351 = vpack.c.b16 %v249, %v247
  %v352 = vpack.c.b16 %v252, %v250
  %v353 = vpack.c.b16 %v253, %v251
  %v354 = vpack.c.b16 %v256, %v254
  %v355 = vpack.c.b16 %v257, %v255
  %v356 = vpack.c.b16 %v260, %v258
  %v357 = vpack.c.b16 %v261, %v259
  %v358 = vpack.c.b16 %v264, %v262
  %v359 = vpack.c.b16 %v265, %v263
  %v360 = vpack.c.b16 %v268, %v266
  %v361 = vpack.c.b16 %v269, %v267
  %v362 = vpack.c.b16 %v272, %v270
  %v363 = vpack.c.b16 %v273, %v271
  %v364 = vpack.c.b16 %v276, %v274
  %v365 = vpack.c.b16 %v277, %v275
  %v366 = vpack.c.b16 %v280, %v278
  %v367 = vpack.c.b16 %v281, %v279
  %v368 = vpack.c.b16 %v284, %v282
  %v369 = vpack.c.b16 %v285, %v283
  %v370 = vpack.c.b16 %v288, %v286
  %v371 = vpack.c.b16 %v289, %v287
  %v372 = vpack.c.b16 %v292, %v290
  %v373 = vpack.c.b16 %v293, %v291
  %v374 = vpack.c.b16 %v296, %v294
  %v375 = vpack.c.b16 %v297, %v295
  %v376 = vpack.c.b16 %v300, %v298
  %v377 = vpack.c.b16 %v301, %v299
  %v378 = vpack.c.b16 %v304, %v302
  %v379 = vpack.c.b16 %v305, %v303
  %v380 = vpack.c.b16 %v308, %v306
  %v381 = vpack.c.b16 %v309, %v307
  %v382 = vpack.c.b16 %v312, %v310
  %v383 = vpack.c.b16 %v313, %v311
  %v384 = vpack.c.b16 %v316, %v314
  %v385 = vpack.c.b16 %v317, %v315
  %v386 = vpack.c.b16 %v320, %v318
  %v387 = vpack.c.b16 %v321, %v319
  %v388 = vpack.c.b16 %v324, %v322
  %v389 = vpack.c.b16 %v325, %v323
  %454 = vmatprep.subr.bf16.mxu0 %v327
  %455 = vmatpush1.bf16.msra.mxu0 %v326
  %456 = vmatprep.subr.bf16.mxu0 %v329
  %457 = vmatpush1.bf16.msra.mxu0 %v328
  %458 = vmatprep.subr.bf16.mxu0 %v331
  %459 = vmatpush1.bf16.msra.mxu0 %v330
  %460 = vmatprep.subr.bf16.mxu0 %v333
  %461 = vmatpush1.bf16.msra.mxu0 %v332
  %462 = vmatprep.subr.bf16.mxu0 %v335
  %463 = vmatpush1.bf16.msra.mxu0 %v334
  %464 = vmatprep.subr.bf16.mxu0 %v337
  %465 = vmatpush1.bf16.msra.mxu0 %v336
  %466 = vmatprep.subr.bf16.mxu0 %v339
  %467 = vmatpush1.bf16.msra.mxu0 %v338
  %468 = vmatprep.subr.bf16.mxu0 %v341
  %469 = vmatpush1.bf16.msra.mxu0 %v340
  %470 = vmatprep.subr.bf16.mxu0 %v343
  %471 = vmatpush1.bf16.msra.mxu0 %v342
  %472 = vmatprep.subr.bf16.mxu0 %v345
  %473 = vmatpush1.bf16.msra.mxu0 %v344
  %474 = vmatprep.subr.bf16.mxu0 %v347
  %475 = vmatpush1.bf16.msra.mxu0 %v346
  %476 = vmatprep.subr.bf16.mxu0 %v349
  %477 = vmatpush1.bf16.msra.mxu0 %v348
  %478 = vmatprep.subr.bf16.mxu0 %v351
  %479 = vmatpush1.bf16.msra.mxu0 %v350
  %480 = vmatprep.subr.bf16.mxu0 %v353
  %481 = vmatpush1.bf16.msra.mxu0 %v352
  %482 = vmatprep.subr.bf16.mxu0 %v355
  %483 = vmatpush1.bf16.msra.mxu0 %v354
  %484 = vmatprep.subr.bf16.mxu0 %v357
  %485 = vmatpush1.bf16.msra.mxu0 %v356
  %486 = vmatprep.mubr.bf16.mxu0 %v127
  %487 = vmatmul.mubr.bf16.gmra.mrb[0].mxu0 %v120
  %v488 = vpop.f32.mrb[0].mxu0
  %v489 = vadd.f32 %v98, %v488
  %v490 = vpop.f32.mrb[0].mxu0
  %v491 = vadd.f32 %v102, %v490
  %v492 = vpop.f32.mrb[0].mxu0
  %v493 = vpop.f32.mrb[0].mxu0
  %494 = vdwg.mxu0
  %495 = vmatprep.subr.bf16.mxu0 %v359
  %496 = vmatpush1.bf16.msra.mxu0 %v358
  %497 = vmatprep.subr.bf16.mxu0 %v361
  %498 = vmatpush1.bf16.msra.mxu0 %v360
  %499 = vmatprep.subr.bf16.mxu0 %v363
  %500 = vmatpush1.bf16.msra.mxu0 %v362
  %501 = vmatprep.subr.bf16.mxu0 %v365
  %502 = vmatpush1.bf16.msra.mxu0 %v364
  %503 = vmatprep.subr.bf16.mxu0 %v367
  %504 = vmatpush1.bf16.msra.mxu0 %v366
  %505 = vmatprep.subr.bf16.mxu0 %v369
  %506 = vmatpush1.bf16.msra.mxu0 %v368
  %507 = vmatprep.subr.bf16.mxu0 %v371
  %508 = vmatpush1.bf16.msra.mxu0 %v370
  %509 = vmatprep.subr.bf16.mxu0 %v373
  %510 = vmatpush1.bf16.msra.mxu0 %v372
  %511 = vmatprep.subr.bf16.mxu0 %v375
  %512 = vmatpush1.bf16.msra.mxu0 %v374
  %513 = vmatprep.subr.bf16.mxu0 %v377
  %514 = vmatpush1.bf16.msra.mxu0 %v376
  %515 = vmatprep.subr.bf16.mxu0 %v379
  %516 = vmatpush1.bf16.msra.mxu0 %v378
  %517 = vmatprep.subr.bf16.mxu0 %v381
  %518 = vmatpush1.bf16.msra.mxu0 %v380
  %519 = vmatprep.subr.bf16.mxu0 %v383
  %520 = vmatpush1.bf16.msra.mxu0 %v382
  %521 = vmatprep.subr.bf16.mxu0 %v385
  %522 = vmatpush1.bf16.msra.mxu0 %v384
  %523 = vmatprep.subr.bf16.mxu0 %v387
  %524 = vmatpush1.bf16.msra.mxu0 %v386
  %525 = vmatprep.subr.bf16.mxu0 %v389
  %526 = vmatpush1.bf16.msra.mxu0 %v388
  %527 = vmatprep.mubr.bf16.mxu0 %v129
  %528 = vmatmul.mubr.bf16.gmra.mrb[0].mxu0 %v128
  %v529 = vpop.f32.mrb[0].mxu0
  %v530 = vadd.f32 %v489, %v529
  %v531 = vpop.f32.mrb[0].mxu0
  %v532 = vadd.f32 %v491, %v531
  %v533 = vpop.f32.mrb[0].mxu0
  %v534 = vpop.f32.mrb[0].mxu0
  %535 = vdwg.mxu0
  %v536 = vmax.f32 %v530, 0.0
  %v537 = vmax.f32 %v532, 0.0
  %v538 = vpack.c.bf16 %v536, %v536
  %v539 = vpack.c.bf16 %v537, %v537
  %v540 = vld [vmem:[%s3] sm:$0xff]
  %v541 = vld [vmem:[%s3 + $0x8] sm:$0xff]
  %v542 = vld [vmem:[%s3 + $0x10] sm:$0xff]
  %v543 = vld [vmem:[%s3 + $0x18] sm:$0xff]
  %v544 = vld [vmem:[%s3 + $0x20] sm:$0xff]
  %v545 = vld [vmem:[%s3 + $0x28] sm:$0xff]
  %v546 = vld [vmem:[%s3 + $0x30] sm:$0xff]
  %v547 = vld [vmem:[%s3 + $0x38] sm:$0xff]
  %v548 = vld [vmem:[%s3 + $0x40] sm:$0xff]
  %v549 = vld [vmem:[%s3 + $0x48] sm:$0xff]
  %v550 = vld [vmem:[%s3 + $0x50] sm:$0xff]
  %v551 = vld [vmem:[%s3 + $0x58] sm:$0xff]
  %v552 = vld [vmem:[%s3 + $0x60] sm:$0xff]
  %v553 = vld [vmem:[%s3 + $0x68] sm:$0xff]
  %v554 = vld [vmem:[%s3 + $0x70] sm:$0xff]
  %v555 = vld [vmem:[%s3 + $0x78] sm:$0xff]
  %v556 = vld [vmem:[%s3 + $0x80] sm:$0xff]
  %v557 = vld [vmem:[%s3 + $0x88] sm:$0xff]
  %v558 = vld [vmem:[%s3 + $0x90] sm:$0xff]
  %v559 = vld [vmem:[%s3 + $0x98] sm:$0xff]
  %v560 = vld [vmem:[%s3 + $0xa0] sm:$0xff]
  %v561 = vld [vmem:[%s3 + $0xa8] sm:$0xff]
  %v562 = vld [vmem:[%s3 + $0xb0] sm:$0xff]
  %v563 = vld [vmem:[%s3 + $0xb8] sm:$0xff]
  %v564 = vld [vmem:[%s3 + $0xc0] sm:$0xff]
  %v565 = vld [vmem:[%s3 + $0xc8] sm:$0xff]
  %v566 = vld [vmem:[%s3 + $0xd0] sm:$0xff]
  %v567 = vld [vmem:[%s3 + $0xd8] sm:$0xff]
  %v568 = vld [vmem:[%s3 + $0xe0] sm:$0xff]
  %v569 = vld [vmem:[%s3 + $0xe8] sm:$0xff]
  %v570 = vld [vmem:[%s3 + $0xf0] sm:$0xff]
  %v571 = vld [vmem:[%s3 + $0xf8] sm:$0xff]
  %v572 = vld [vmem:[%s4] sm:$0x3]
  %v574 = vlaneseq
  %v575 = vshrl.u32 %v574, 7
  %v576 = vsub.s32 0, %v575
  %v577 = vrot.slane %v572, %v576
  %v578 = vlaneseq
  %v579 = vshrl.u32 %v578, 7
  %v580 = vsub.s32 1, %v579
  %v581 = vrot.slane %v572, %v580
  %v616 = vunpack.c.l.b16 %v540
  %v617 = vunpack.c.h.b16 %v540
  %v618 = vunpack.c.l.b16 %v541
  %v619 = vunpack.c.h.b16 %v541
  %v620 = vunpack.c.l.b16 %v542
  %v621 = vunpack.c.h.b16 %v542
  %v622 = vunpack.c.l.b16 %v543
  %v623 = vunpack.c.h.b16 %v543
  %v624 = vunpack.c.l.b16 %v544
  %v625 = vunpack.c.h.b16 %v544
  %v626 = vunpack.c.l.b16 %v545
  %v627 = vunpack.c.h.b16 %v545
  %v628 = vunpack.c.l.b16 %v546
  %v629 = vunpack.c.h.b16 %v546
  %v630 = vunpack.c.l.b16 %v547
  %v631 = vunpack.c.h.b16 %v547
  %v632 = vunpack.c.l.b16 %v548
  %v633 = vunpack.c.h.b16 %v548
  %v634 = vunpack.c.l.b16 %v549
  %v635 = vunpack.c.h.b16 %v549
  %v636 = vunpack.c.l.b16 %v550
  %v637 = vunpack.c.h.b16 %v550
  %v638 = vunpack.c.l.b16 %v551
  %v639 = vunpack.c.h.b16 %v551
  %v640 = vunpack.c.l.b16 %v552
  %v641 = vunpack.c.h.b16 %v552
  %v642 = vunpack.c.l.b16 %v553
  %v643 = vunpack.c.h.b16 %v553
  %v644 = vunpack.c.l.b16 %v554
  %v645 = vunpack.c.h.b16 %v554
  %v646 = vunpack.c.l.b16 %v555
  %v647 = vunpack.c.h.b16 %v555
  %v648 = vunpack.c.l.b16 %v556
  %v649 = vunpack.c.h.b16 %v556
  %v650 = vunpack.c.l.b16 %v557
  %v651 = vunpack.c.h.b16 %v557
  %v652 = vunpack.c.l.b16 %v558
  %v653 = vunpack.c.h.b16 %v558
  %v654 = vunpack.c.l.b16 %v559
  %v655 = vunpack.c.h.b16 %v559
  %v656 = vunpack.c.l.b16 %v560
  %v657 = vunpack.c.h.b16 %v560
  %v658 = vunpack.c.l.b16 %v561
  %v659 = vunpack.c.h.b16 %v561
  %v660 = vunpack.c.l.b16 %v562
  %v661 = vunpack.c.h.b16 %v562
  %v662 = vunpack.c.l.b16 %v563
  %v663 = vunpack.c.h.b16 %v563
  %v664 = vunpack.c.l.b16 %v564
  %v665 = vunpack.c.h.b16 %v564
  %v666 = vunpack.c.l.b16 %v565
  %v667 = vunpack.c.h.b16 %v565
  %v668 = vunpack.c.l.b16 %v566
  %v669 = vunpack.c.h.b16 %v566
  %v670 = vunpack.c.l.b16 %v567
  %v671 = vunpack.c.h.b16 %v567
  %v672 = vunpack.c.l.b16 %v568
  %v673 = vunpack.c.h.b16 %v568
  %v674 = vunpack.c.l.b16 %v569
  %v675 = vunpack.c.h.b16 %v569
  %v676 = vunpack.c.l.b16 %v570
  %v677 = vunpack.c.h.b16 %v570
  %v678 = vunpack.c.l.b16 %v571
  %v679 = vunpack.c.h.b16 %v571
  %v680 = vpack.c.b16 %v618, %v616
  %v681 = vpack.c.b16 %v619, %v617
  %v682 = vpack.c.b16 %v622, %v620
  %v683 = vpack.c.b16 %v623, %v621
  %v684 = vpack.c.b16 %v626, %v624
  %v685 = vpack.c.b16 %v627, %v625
  %v686 = vpack.c.b16 %v630, %v628
  %v687 = vpack.c.b16 %v631, %v629
  %v688 = vpack.c.b16 %v634, %v632
  %v689 = vpack.c.b16 %v635, %v633
  %v690 = vpack.c.b16 %v638, %v636
  %v691 = vpack.c.b16 %v639, %v637
  %v692 = vpack.c.b16 %v642, %v640
  %v693 = vpack.c.b16 %v643, %v641
  %v694 = vpack.c.b16 %v646, %v644
  %v695 = vpack.c.b16 %v647, %v645
  %v696 = vpack.c.b16 %v650, %v648
  %v697 = vpack.c.b16 %v651, %v649
  %v698 = vpack.c.b16 %v654, %v652
  %v699 = vpack.c.b16 %v655, %v653
  %v700 = vpack.c.b16 %v658, %v656
  %v701 = vpack.c.b16 %v659, %v657
  %v702 = vpack.c.b16 %v662, %v660
  %v703 = vpack.c.b16 %v663, %v661
  %v704 = vpack.c.b16 %v666, %v664
  %v705 = vpack.c.b16 %v667, %v665
  %v706 = vpack.c.b16 %v670, %v668
  %v707 = vpack.c.b16 %v671, %v669
  %v708 = vpack.c.b16 %v674, %v672
  %v709 = vpack.c.b16 %v675, %v673
  %v710 = vpack.c.b16 %v678, %v676
  %v711 = vpack.c.b16 %v679, %v677
  %744 = vmatprep.subr.bf16.mxu0 %v681
  %745 = vmatpush1.bf16.msra.mxu0 %v680
  %746 = vmatprep.subr.bf16.mxu0 %v683
  %747 = vmatpush1.bf16.msra.mxu0 %v682
  %748 = vmatprep.subr.bf16.mxu0 %v685
  %749 = vmatpush1.bf16.msra.mxu0 %v684
  %750 = vmatprep.subr.bf16.mxu0 %v687
  %751 = vmatpush1.bf16.msra.mxu0 %v686
  %752 = vmatprep.subr.bf16.mxu0 %v689
  %753 = vmatpush1.bf16.msra.mxu0 %v688
  %754 = vmatprep.subr.bf16.mxu0 %v691
  %755 = vmatpush1.bf16.msra.mxu0 %v690
  %756 = vmatprep.subr.bf16.mxu0 %v693
  %757 = vmatpush1.bf16.msra.mxu0 %v692
  %758 = vmatprep.subr.bf16.mxu0 %v695
  %759 = vmatpush1.bf16.msra.mxu0 %v694
  %760 = vmatprep.subr.bf16.mxu0 %v697
  %761 = vmatpush1.bf16.msra.mxu0 %v696
  %762 = vmatprep.subr.bf16.mxu0 %v699
  %763 = vmatpush1.bf16.msra.mxu0 %v698
  %764 = vmatprep.subr.bf16.mxu0 %v701
  %765 = vmatpush1.bf16.msra.mxu0 %v700
  %766 = vmatprep.subr.bf16.mxu0 %v703
  %767 = vmatpush1.bf16.msra.mxu0 %v702
  %768 = vmatprep.subr.bf16.mxu0 %v705
  %769 = vmatpush1.bf16.msra.mxu0 %v704
  %770 = vmatprep.subr.bf16.mxu0 %v707
  %771 = vmatpush1.bf16.msra.mxu0 %v706
  %772 = vmatprep.subr.bf16.mxu0 %v709
  %773 = vmatpush1.bf16.msra.mxu0 %v708
  %774 = vmatprep.subr.bf16.mxu0 %v711
  %775 = vmatpush1.bf16.msra.mxu0 %v710
  %776 = vmatprep.mubr.bf16.mxu0 %v539
  %777 = vmatmul.mubr.bf16.gmra.mrb[0].mxu0 %v538
  %v778 = vpop.f32.mrb[0].mxu0
  %v779 = vadd.f32 %v577, %v778
  %v780 = vpop.f32.mrb[0].mxu0
  %v781 = vadd.f32 %v581, %v780
  %v782 = vpop.f32.mrb[0].mxu0
  %v783 = vpop.f32.mrb[0].mxu0
  %784 = vdwg.mxu0
  %v785 = vmax.f32 %v779, 0.0
  %v786 = vmax.f32 %v781, 0.0
  %v787 = vld [vmem:[%s5] sm:$0x3]
  %v789 = vlaneseq
  %v790 = vshrl.u32 %v789, 7
  %v791 = vsub.s32 0, %v790
  %v792 = vrot.slane %v787, %v791
  %v793 = vlaneseq
  %v794 = vshrl.u32 %v793, 7
  %v795 = vsub.s32 1, %v794
  %v796 = vrot.slane %v787, %v795
  %v799 = vmul.f32 %v785, %v792
  %v800 = vmul.f32 %v786, %v796
  %vm801 = vcmask 1041408
  %v802 = vsel %vm801, %v799, 0.0
  %v803 = vsel %vm801, %v800, 0.0
  %v804 = vadd.f32 %v802, %v803
  %805 = vadd.xlane.f32.xlu0 %v804
  %v806 = vpop.xlane.xlu0 %805
  %v807 = vld [vmem:[#allocation2] sm:$0x1]
  %v809 = vlaneseq
  %v810 = vshrl.u32 %v809, 7
  %v811 = vsub.s32 0, %v810
  %v812 = vrot.slane %v807, %v811
  %v814 = vadd.f32 %v806, %v812
  %vm815 = vcmask 1024
  %816 = vst.msk [vmem:[%s7] sm:$0x3] %vm815, %v814
  // Predicated region
  $region30: #{var_forward.7} parent=0 // pred_check
    _
  $region31: #{var_forward.7} parent=0 // pred_check_branch
    %818 = sbr.rel (0) target = $region33
  $region32: #{var_forward.7} parent=0 // pred_region
    _
  $region33: #{var_forward.7} parent=0 // pred_fallthru
    _
  // Predicated region
  $region34: #{var_forward.7} parent=0 // pred_check
    _
  $region35: #{var_forward.7} parent=0 // pred_check_branch
    %820 = sbr.rel (0) target = $region37
  $region36: #{var_forward.7} parent=0 // pred_region
    _
  $region37: #{var_forward.7} parent=0 // pred_fallthru
    _

</llo_original>
